<compile_context>
chip_gen: v5e
topology: v5e:2x2
jax: 0.10.0
libtpu: 0.0.40
codegen_flags: <defaults>
</compile_context>

<pallas_src>
import jax
import jax.numpy as jnp
from jax.experimental import pallas as pl
from jax.experimental.pallas import tpu as pltpu

RBF_SIZE = 10
FEATURES_SIZE = 100
NUM_ACTIONS = 4

# Lane-dense internal widths.
F_PAD = 128                      # features / goal features (100 -> 128)
H_A = 128                        # agent hidden (81 -> 128)
H_P = 128                        # policy hidden (64 -> 128)
H_E = 128                        # env hidden (64 -> 128)
IN_PAD = 32                      # concat(ap|pg|eg) = 30 -> 32
H_IN = H_A + H_P + H_E           # 384 (block-diagonal first layer output)
C_HID = 256                      # concat-layer hidden
SF_FLAT = NUM_ACTIONS * FEATURES_SIZE   # 400 (compact public layout)


def _round_up(x, m):
    return -(-x // m) * m


# ---------------------------------------------------------------------------
# Kernel
# ---------------------------------------------------------------------------

def _usf_kernel(
    xin_ref,                                   # [TB, 32]  = [ap | pg | eg | 0 0]
    win_ref, bin_ref,                          # [32, 384], [1, 384] fused front-end
    aw2_ref, ab2_ref,                          # [128, 128], [1, 128] agent 2nd Linear
    pw2_ref, pb2_ref,                          # [128, 128], [1, 128] policy 2nd Linear
    cw1a_ref, cw1p_ref, cb1_ref,               # [128, 256] x2, [1, 256] concat 1st
    cw2_ref, cb2_ref,                          # [256, 400], [1, 400]  concat 2nd (compact)
    ew2_ref, eb2_ref,                          # [128, 128], [1, 128]  env 2nd Linear
    ew3r_ref, eb3r_ref,                        # [128, 400], [1, 400]  env 3rd, 4x replicated
    qsel_ref,                                  # [400, 4] 0/1 action selection
    q_ref, sf_ref, env_w_ref, feat_ref,        # outputs
):
    f32 = jnp.float32

    def linear(x, w_ref, b_ref):
        return jnp.dot(x, w_ref[...], preferred_element_type=f32) + b_ref[...]

    # Fused block-diagonal first layer for all three heads (one MXU pass, K=32).
    x = xin_ref[...]                                            # [TB, 32]
    h_in = jnp.maximum(linear(x, win_ref, bin_ref), 0.0)        # [TB, 384]
    h_a = h_in[:, :H_A]                                         # 128-aligned slices
    h_p = h_in[:, H_A:H_A + H_P]
    h_e = h_in[:, H_A + H_P:]

    # agent_position_layer -> features  (padded cols 100.. are exact zeros)
    features = linear(h_a, aw2_ref, ab2_ref)                    # [TB, 128]
    feat_ref[...] = features[:, :FEATURES_SIZE]                 # compact store

    # policy_goal_layer -> goal_position_features
    goal_features = linear(h_p, pw2_ref, pb2_ref)               # [TB, 128]

    # concatenation_layer: concat replaced by two MXU accumulations.
    h = jnp.maximum(
        jnp.dot(features, cw1a_ref[...], preferred_element_type=f32)
        + jnp.dot(goal_features, cw1p_ref[...], preferred_element_type=f32)
        + cb1_ref[...],
        0.0)                                                    # [TB, 256]

    # sf directly in compact public layout [TB, 400]; single full-block store.
    sf = linear(h, cw2_ref, cb2_ref)
    sf_ref[...] = sf

    # env_goal_layer; ew3r replicates the 100 output cols 4x so env_w4 lines up
    # with sf's 4 action blocks without any lane shuffles.
    h2 = jnp.maximum(linear(h_e, ew2_ref, eb2_ref), 0.0)        # [TB, 128]
    env_w4 = linear(h2, ew3r_ref, eb3r_ref)                     # [TB, 400]
    env_w_ref[...] = env_w4[:, :FEATURES_SIZE]                  # compact store

    # q[b, a] = sum_f sf[b, a, f] * env_w[b, f]  via one mul + tiny matmul.
    q_ref[...] = jnp.dot(sf * env_w4, qsel_ref[...],
                         preferred_element_type=f32)            # [TB, 4]


# ---------------------------------------------------------------------------
# Parameter construction / padding
# ---------------------------------------------------------------------------

def _init_linear(key, fan_in, fan_out):
    kw, kb = jax.random.split(key)
    bound = 1.0 / jnp.sqrt(jnp.float32(fan_in))
    w = jax.random.uniform(kw, (fan_in, fan_out), jnp.float32, -bound, bound)
    b = jax.random.uniform(kb, (1, fan_out), jnp.float32, -bound, bound)
    return w, b


def make_params(key):
    """Original (unpadded) parameters mirroring the PyTorch module layout."""
    keys = jax.random.split(key, 9)
    p = {}
    p["aw1"], p["ab1"] = _init_linear(keys[0], RBF_SIZE, 81)
    p["aw2"], p["ab2"] = _init_linear(keys[1], 81, FEATURES_SIZE)
    p["pw1"], p["pb1"] = _init_linear(keys[2], RBF_SIZE, 64)
    p["pw2"], p["pb2"] = _init_linear(keys[3], 64, FEATURES_SIZE)
    p["cw1"], p["cb1"] = _init_linear(keys[4], 2 * FEATURES_SIZE, 256)
    p["cw2"], p["cb2"] = _init_linear(keys[5], 256, NUM_ACTIONS * FEATURES_SIZE)
    p["ew1"], p["eb1"] = _init_linear(keys[6], RBF_SIZE, 64)
    p["ew2"], p["eb2"] = _init_linear(keys[7], 64, 64)
    p["ew3"], p["eb3"] = _init_linear(keys[8], 64, FEATURES_SIZE)
    return p


def pad_params(p):
    """Build lane-dense, zero-padded kernel operands (once, at prep time)."""
    z = lambda shape: jnp.zeros(shape, jnp.float32)

    # Fused block-diagonal front-end: [32, 384]
    win = z((IN_PAD, H_IN))
    win = win.at[0:RBF_SIZE, 0:81].set(p["aw1"])
    win = win.at[RBF_SIZE:2 * RBF_SIZE, H_A:H_A + 64].set(p["pw1"])
    win = win.at[2 * RBF_SIZE:3 * RBF_SIZE, H_A + H_P:H_A + H_P + 64].set(p["ew1"])
    bin_ = z((1, H_IN))
    bin_ = bin_.at[:, 0:81].set(p["ab1"])
    bin_ = bin_.at[:, H_A:H_A + 64].set(p["pb1"])
    bin_ = bin_.at[:, H_A + H_P:H_A + H_P + 64].set(p["eb1"])

    aw2 = z((H_A, F_PAD)).at[0:81, 0:FEATURES_SIZE].set(p["aw2"])
    ab2 = z((1, F_PAD)).at[:, 0:FEATURES_SIZE].set(p["ab2"])
    pw2 = z((H_P, F_PAD)).at[0:64, 0:FEATURES_SIZE].set(p["pw2"])
    pb2 = z((1, F_PAD)).at[:, 0:FEATURES_SIZE].set(p["pb2"])

    # cw1 split into feature-half / goal-half (removes the in-kernel concat).
    cw1a = z((F_PAD, C_HID)).at[0:FEATURES_SIZE, :].set(p["cw1"][0:FEATURES_SIZE])
    cw1p = z((F_PAD, C_HID)).at[0:FEATURES_SIZE, :].set(
        p["cw1"][FEATURES_SIZE:2 * FEATURES_SIZE])
    cb1 = p["cb1"]                                    # (1, 256) already aligned

    # Concat 2nd Linear used in its native compact layout (256, 400) so the
    # kernel's sf output is already the public layout.
    cw2 = p["cw2"]
    cb2 = p["cb2"]

    ew2 = z((H_E, H_E)).at[0:64, 0:64].set(p["ew2"])
    eb2 = z((1, H_E)).at[:, 0:64].set(p["eb2"])
    # env 3rd Linear replicated 4x along output columns (rows padded 64 -> 128)
    # so env_w4[:, a*100:(a+1)*100] == env_w for every action a.
    ew3r = z((H_E, SF_FLAT)).at[0:64, :].set(jnp.tile(p["ew3"], (1, NUM_ACTIONS)))
    eb3r = jnp.tile(p["eb3"], (1, NUM_ACTIONS))

    # 0/1 action selection matrix for the q reduction.
    qsel = z((SF_FLAT, NUM_ACTIONS))
    for a in range(NUM_ACTIONS):
        qsel = qsel.at[a * FEATURES_SIZE:(a + 1) * FEATURES_SIZE, a].set(1.0)

    return dict(win=win, bin=bin_, aw2=aw2, ab2=ab2, pw2=pw2, pb2=pb2,
                cw1a=cw1a, cw1p=cw1p, cb1=cb1, cw2=cw2, cb2=cb2,
                ew2=ew2, eb2=eb2, ew3r=ew3r, eb3r=eb3r, qsel=qsel)


_WEIGHT_ORDER = ["win", "bin", "aw2", "ab2", "pw2", "pb2",
                 "cw1a", "cw1p", "cb1", "cw2", "cb2",
                 "ew2", "eb2", "ew3r", "eb3r", "qsel"]


# ---------------------------------------------------------------------------
# Wrapper
# ---------------------------------------------------------------------------

@jax.jit
def state_goal_rbf_usf(agent_position_rbf, policy_goal_position_rbf,
                       env_goal_position_rbf, kernel_params):
    B = agent_position_rbf.shape[0]

    # Batch tiling: big tiles (<= 512 rows) amortize per-grid-step overhead,
    # but keep >= 2 grid steps when possible so both v7x TensorCores get work.
    B8 = _round_up(B, 8)
    if B8 <= 8:
        TB = B8
    else:
        TB = min(512, _round_up(-(-B8 // 2), 8))      # ~half the batch, mult of 8
    B_pad = _round_up(B, TB)
    grid = (B_pad // TB,)

    # Fused, padded input: [B_pad, 32] = [ap(10) | pg(10) | eg(10) | 0 0]
    xin = jnp.concatenate(
        [agent_position_rbf, policy_goal_position_rbf, env_goal_position_rbf],
        axis=1).astype(jnp.float32)
    xin = jnp.pad(xin, ((0, B_pad - B), (0, IN_PAD - 3 * RBF_SIZE)))

    weights = [kernel_params[k] for k in _WEIGHT_ORDER]

    act_spec = pl.BlockSpec((TB, IN_PAD), lambda i: (i, 0))
    # Weights stay VMEM-resident across the batch grid (same block every step).
    w_specs = [pl.BlockSpec(w.shape, lambda i: (0, 0)) for w in weights]

    out_shapes = (
        jax.ShapeDtypeStruct((B_pad, NUM_ACTIONS), jnp.float32),     # q
        jax.ShapeDtypeStruct((B_pad, SF_FLAT), jnp.float32),         # sf (compact flat)
        jax.ShapeDtypeStruct((B_pad, FEATURES_SIZE), jnp.float32),   # env_goal_weights
        jax.ShapeDtypeStruct((B_pad, FEATURES_SIZE), jnp.float32),   # features
    )
    out_specs = (
        pl.BlockSpec((TB, NUM_ACTIONS), lambda i: (i, 0)),
        pl.BlockSpec((TB, SF_FLAT), lambda i: (i, 0)),
        pl.BlockSpec((TB, FEATURES_SIZE), lambda i: (i, 0)),
        pl.BlockSpec((TB, FEATURES_SIZE), lambda i: (i, 0)),
    )

    # Advisory cost estimate.
    macs_per_row = (IN_PAD * H_IN + H_A * F_PAD + H_P * F_PAD
                    + 2 * F_PAD * C_HID + C_HID * SF_FLAT
                    + H_E * H_E + H_E * SF_FLAT + SF_FLAT * NUM_ACTIONS)
    weight_bytes = sum(int(w.size) * 4 for w in weights)
    io_bytes = B_pad * (IN_PAD + NUM_ACTIONS + SF_FLAT + 2 * FEATURES_SIZE) * 4
    cost = pl.CostEstimate(flops=2 * B_pad * macs_per_row,
                           transcendentals=0,
                           bytes_accessed=weight_bytes + io_bytes)

    q, sf_flat, env_w, features = pl.pallas_call(
        _usf_kernel,
        out_shape=out_shapes,
        grid=grid,
        in_specs=[act_spec] + w_specs,
        out_specs=out_specs,
        compiler_params=pltpu.CompilerParams(
            dimension_semantics=("parallel",)),
        cost_estimate=cost,
    )(xin, *weights)

    # Epilogue: only a batch slice (when padded) + a free row-major reshape.
    if B_pad != B:
        q, sf_flat, env_w, features = (a[:B] for a in (q, sf_flat, env_w, features))
    sf = sf_flat.reshape(B, NUM_ACTIONS, FEATURES_SIZE)
    return q, sf, env_w, features


# ---------------------------------------------------------------------------
# Plain-JAX reference mirroring the PyTorch forward
# ---------------------------------------------------------------------------

def _reference(agent_position_rbf, policy_goal_position_rbf,
               env_goal_position_rbf, p):
    relu = jax.nn.relu
    feats = relu(agent_position_rbf @ p["aw1"] + p["ab1"]) @ p["aw2"] + p["ab2"]
    gfeat = relu(policy_goal_position_rbf @ p["pw1"] + p["pb1"]) @ p["pw2"] + p["pb2"]
    joined = jnp.concatenate([feats, gfeat], axis=1)
    sf = relu(joined @ p["cw1"] + p["cb1"]) @ p["cw2"] + p["cb2"]
    sf = sf.reshape(sf.shape[0], NUM_ACTIONS, FEATURES_SIZE)
    h = relu(env_goal_position_rbf @ p["ew1"] + p["eb1"])
    h = relu(h @ p["ew2"] + p["eb2"])
    env_w = h @ p["ew3"] + p["eb3"]
    q = jnp.sum(sf * env_w[:, None, :], axis=2)
    return q, sf, env_w, feats


if __name__ == "__main__":
    key = jax.random.PRNGKey(0)
    k_params, k_data = jax.random.split(key)

    params = make_params(k_params)
    kernel_params = pad_params(params)

    def run_and_check(B, data_key):
        ka, kp, ke = jax.random.split(data_key, 3)
        ap = jax.random.normal(ka, (B, RBF_SIZE), jnp.float32)
        pg = jax.random.normal(kp, (B, RBF_SIZE), jnp.float32)
        eg = jax.random.normal(ke, (B, RBF_SIZE), jnp.float32)

        q, sf, env_w, feats = state_goal_rbf_usf(ap, pg, eg, kernel_params)
        jax.block_until_ready((q, sf, env_w, feats))

        q_r, sf_r, env_w_r, feat_r = _reference(ap, pg, eg, params)
        assert q.shape == (B, NUM_ACTIONS)
        assert sf.shape == (B, NUM_ACTIONS, FEATURES_SIZE)
        assert env_w.shape == (B, FEATURES_SIZE)
        assert feats.shape == (B, FEATURES_SIZE)
        assert jnp.allclose(q, q_r, atol=1e-4, rtol=1e-4)
        assert jnp.allclose(sf, sf_r, atol=1e-4, rtol=1e-4)
        assert jnp.allclose(env_w, env_w_r, atol=1e-4, rtol=1e-4)
        assert jnp.allclose(feats, feat_r, atol=1e-4, rtol=1e-4)

    k1, k2 = jax.random.split(k_data)
    run_and_check(8, k1)    # single-tile path (grid = 1)
    run_and_check(20, k2)   # multi-tile + batch-padding path (grid = 2)

    print("KERNEL_OK")
</pallas_src>

<mosaic_0001>
module attributes {stable_mosaic.version = 11 : i64} {
  func.func @_usf_kernel(%arg0: i32, %arg1: memref<8x32xf32, #tpu.memory_space<vmem>>, %arg2: memref<32x384xf32, #tpu.memory_space<vmem>>, %arg3: memref<1x384xf32, #tpu.memory_space<vmem>>, %arg4: memref<128x128xf32, #tpu.memory_space<vmem>>, %arg5: memref<1x128xf32, #tpu.memory_space<vmem>>, %arg6: memref<128x128xf32, #tpu.memory_space<vmem>>, %arg7: memref<1x128xf32, #tpu.memory_space<vmem>>, %arg8: memref<128x256xf32, #tpu.memory_space<vmem>>, %arg9: memref<128x256xf32, #tpu.memory_space<vmem>>, %arg10: memref<1x256xf32, #tpu.memory_space<vmem>>, %arg11: memref<256x400xf32, #tpu.memory_space<vmem>>, %arg12: memref<1x400xf32, #tpu.memory_space<vmem>>, %arg13: memref<128x128xf32, #tpu.memory_space<vmem>>, %arg14: memref<1x128xf32, #tpu.memory_space<vmem>>, %arg15: memref<128x400xf32, #tpu.memory_space<vmem>>, %arg16: memref<1x400xf32, #tpu.memory_space<vmem>>, %arg17: memref<400x4xf32, #tpu.memory_space<vmem>>, %arg18: memref<8x4xf32, #tpu.memory_space<vmem>>, %arg19: memref<8x400xf32, #tpu.memory_space<vmem>>, %arg20: memref<8x100xf32, #tpu.memory_space<vmem>>, %arg21: memref<8x100xf32, #tpu.memory_space<vmem>>) attributes {dimension_semantics = [#tpu.dimension_semantics<parallel>], iteration_bounds = array<i64: 1>, scalar_prefetch = 0 : i64, scratch_operands = 0 : i64, tpu.core_type = #tpu.core_type<tc>, window_params = [{transform_indices = @transform_0, window_bounds = array<i64: 8, 32>}, {pipeline_mode = #tpu.pipeline_mode<synchronous>, transform_indices = @transform_1, window_bounds = array<i64: 32, 384>}, {pipeline_mode = #tpu.pipeline_mode<synchronous>, transform_indices = @transform_2, window_bounds = array<i64: 1, 384>}, {pipeline_mode = #tpu.pipeline_mode<synchronous>, transform_indices = @transform_3, window_bounds = array<i64: 128, 128>}, {pipeline_mode = #tpu.pipeline_mode<synchronous>, transform_indices = @transform_4, window_bounds = array<i64: 1, 128>}, {pipeline_mode = #tpu.pipeline_mode<synchronous>, transform_indices = @transform_5, window_bounds = array<i64: 128, 128>}, {pipeline_mode = #tpu.pipeline_mode<synchronous>, transform_indices = @transform_6, window_bounds = array<i64: 1, 128>}, {pipeline_mode = #tpu.pipeline_mode<synchronous>, transform_indices = @transform_7, window_bounds = array<i64: 128, 256>}, {pipeline_mode = #tpu.pipeline_mode<synchronous>, transform_indices = @transform_8, window_bounds = array<i64: 128, 256>}, {pipeline_mode = #tpu.pipeline_mode<synchronous>, transform_indices = @transform_9, window_bounds = array<i64: 1, 256>}, {pipeline_mode = #tpu.pipeline_mode<synchronous>, transform_indices = @transform_10, window_bounds = array<i64: 256, 400>}, {pipeline_mode = #tpu.pipeline_mode<synchronous>, transform_indices = @transform_11, window_bounds = array<i64: 1, 400>}, {pipeline_mode = #tpu.pipeline_mode<synchronous>, transform_indices = @transform_12, window_bounds = array<i64: 128, 128>}, {pipeline_mode = #tpu.pipeline_mode<synchronous>, transform_indices = @transform_13, window_bounds = array<i64: 1, 128>}, {pipeline_mode = #tpu.pipeline_mode<synchronous>, transform_indices = @transform_14, window_bounds = array<i64: 128, 400>}, {pipeline_mode = #tpu.pipeline_mode<synchronous>, transform_indices = @transform_15, window_bounds = array<i64: 1, 400>}, {pipeline_mode = #tpu.pipeline_mode<synchronous>, transform_indices = @transform_16, window_bounds = array<i64: 400, 4>}, {transform_indices = @transform_17, window_bounds = array<i64: 8, 4>}, {transform_indices = @transform_18, window_bounds = array<i64: 8, 400>}, {transform_indices = @transform_19, window_bounds = array<i64: 8, 100>}, {transform_indices = @transform_20, window_bounds = array<i64: 8, 100>}]} {
    %c0 = arith.constant 0 : index
    %c0_0 = arith.constant 0 : index
    %0 = vector.load %arg1[%c0, %c0_0] : memref<8x32xf32, #tpu.memory_space<vmem>>, vector<8x32xf32>
    %c0_1 = arith.constant 0 : index
    %c0_2 = arith.constant 0 : index
    %1 = vector.load %arg2[%c0_1, %c0_2] : memref<32x384xf32, #tpu.memory_space<vmem>>, vector<32x384xf32>
    %cst = arith.constant dense<0.000000e+00> : vector<8x384xf32>
    %2 = tpu.matmul %0, %1, %cst {dimension_numbers = #tpu.dot_dimension_numbers<[1], [0], [0], [1], [0, 0, 1, 1], [], []>} : vector<8x32xf32>, vector<32x384xf32>, vector<8x384xf32> -> vector<8x384xf32>
    %c0_3 = arith.constant 0 : index
    %c0_4 = arith.constant 0 : index
    %3 = vector.load %arg3[%c0_3, %c0_4] : memref<1x384xf32, #tpu.memory_space<vmem>>, vector<1x384xf32>
    %4 = vector.broadcast %3 : vector<1x384xf32> to vector<8x384xf32>
    %5 = arith.addf %2, %4 : vector<8x384xf32>
    %cst_5 = arith.constant 0.000000e+00 : f32
    %6 = vector.broadcast %cst_5 : f32 to vector<8x384xf32>
    %7 = arith.maximumf %5, %6 : vector<8x384xf32>
    %8 = vector.extract_strided_slice %7 {offsets = [0, 0], sizes = [8, 128], strides = [1, 1]} : vector<8x384xf32> to vector<8x128xf32>
    %9 = vector.extract_strided_slice %7 {offsets = [0, 128], sizes = [8, 128], strides = [1, 1]} : vector<8x384xf32> to vector<8x128xf32>
    %10 = vector.extract_strided_slice %7 {offsets = [0, 256], sizes = [8, 128], strides = [1, 1]} : vector<8x384xf32> to vector<8x128xf32>
    %c0_6 = arith.constant 0 : index
    %c0_7 = arith.constant 0 : index
    %11 = vector.load %arg4[%c0_6, %c0_7] : memref<128x128xf32, #tpu.memory_space<vmem>>, vector<128x128xf32>
    %cst_8 = arith.constant dense<0.000000e+00> : vector<8x128xf32>
    %12 = tpu.matmul %8, %11, %cst_8 {dimension_numbers = #tpu.dot_dimension_numbers<[1], [0], [0], [1], [0, 0, 1, 1], [], []>} : vector<8x128xf32>, vector<128x128xf32>, vector<8x128xf32> -> vector<8x128xf32>
    %c0_9 = arith.constant 0 : index
    %c0_10 = arith.constant 0 : index
    %13 = vector.load %arg5[%c0_9, %c0_10] : memref<1x128xf32, #tpu.memory_space<vmem>>, vector<1x128xf32>
    %14 = vector.broadcast %13 : vector<1x128xf32> to vector<8x128xf32>
    %15 = arith.addf %12, %14 : vector<8x128xf32>
    %16 = vector.extract_strided_slice %15 {offsets = [0, 0], sizes = [8, 100], strides = [1, 1]} : vector<8x128xf32> to vector<8x100xf32>
    %c0_11 = arith.constant 0 : index
    %c0_12 = arith.constant 0 : index
    %17 = vector.load %arg21[%c0_11, %c0_12] : memref<8x100xf32, #tpu.memory_space<vmem>>, vector<8x100xf32>
    tpu.vector_store %arg21[%c0_11, %c0_12], %16 {strides = array<i32>} : memref<8x100xf32, #tpu.memory_space<vmem>>, vector<8x100xf32>,
    %c0_13 = arith.constant 0 : index
    %c0_14 = arith.constant 0 : index
    %18 = vector.load %arg6[%c0_13, %c0_14] : memref<128x128xf32, #tpu.memory_space<vmem>>, vector<128x128xf32>
    %cst_15 = arith.constant dense<0.000000e+00> : vector<8x128xf32>
    %19 = tpu.matmul %9, %18, %cst_15 {dimension_numbers = #tpu.dot_dimension_numbers<[1], [0], [0], [1], [0, 0, 1, 1], [], []>} : vector<8x128xf32>, vector<128x128xf32>, vector<8x128xf32> -> vector<8x128xf32>
    %c0_16 = arith.constant 0 : index
    %c0_17 = arith.constant 0 : index
    %20 = vector.load %arg7[%c0_16, %c0_17] : memref<1x128xf32, #tpu.memory_space<vmem>>, vector<1x128xf32>
    %21 = vector.broadcast %20 : vector<1x128xf32> to vector<8x128xf32>
    %22 = arith.addf %19, %21 : vector<8x128xf32>
    %c0_18 = arith.constant 0 : index
    %c0_19 = arith.constant 0 : index
    %23 = vector.load %arg8[%c0_18, %c0_19] : memref<128x256xf32, #tpu.memory_space<vmem>>, vector<128x256xf32>
    %cst_20 = arith.constant dense<0.000000e+00> : vector<8x256xf32>
    %24 = tpu.matmul %15, %23, %cst_20 {dimension_numbers = #tpu.dot_dimension_numbers<[1], [0], [0], [1], [0, 0, 1, 1], [], []>} : vector<8x128xf32>, vector<128x256xf32>, vector<8x256xf32> -> vector<8x256xf32>
    %c0_21 = arith.constant 0 : index
    %c0_22 = arith.constant 0 : index
    %25 = vector.load %arg9[%c0_21, %c0_22] : memref<128x256xf32, #tpu.memory_space<vmem>>, vector<128x256xf32>
    %cst_23 = arith.constant dense<0.000000e+00> : vector<8x256xf32>
    %26 = tpu.matmul %22, %25, %cst_23 {dimension_numbers = #tpu.dot_dimension_numbers<[1], [0], [0], [1], [0, 0, 1, 1], [], []>} : vector<8x128xf32>, vector<128x256xf32>, vector<8x256xf32> -> vector<8x256xf32>
    %27 = arith.addf %24, %26 : vector<8x256xf32>
    %c0_24 = arith.constant 0 : index
    %c0_25 = arith.constant 0 : index
    %28 = vector.load %arg10[%c0_24, %c0_25] : memref<1x256xf32, #tpu.memory_space<vmem>>, vector<1x256xf32>
    %29 = vector.broadcast %28 : vector<1x256xf32> to vector<8x256xf32>
    %30 = arith.addf %27, %29 : vector<8x256xf32>
    %cst_26 = arith.constant 0.000000e+00 : f32
    %31 = vector.broadcast %cst_26 : f32 to vector<8x256xf32>
    %32 = arith.maximumf %30, %31 : vector<8x256xf32>
    %c0_27 = arith.constant 0 : index
    %c0_28 = arith.constant 0 : index
    %33 = vector.load %arg11[%c0_27, %c0_28] : memref<256x400xf32, #tpu.memory_space<vmem>>, vector<256x400xf32>
    %cst_29 = arith.constant dense<0.000000e+00> : vector<8x400xf32>
    %34 = tpu.matmul %32, %33, %cst_29 {dimension_numbers = #tpu.dot_dimension_numbers<[1], [0], [0], [1], [0, 0, 1, 1], [], []>} : vector<8x256xf32>, vector<256x400xf32>, vector<8x400xf32> -> vector<8x400xf32>
    %c0_30 = arith.constant 0 : index
    %c0_31 = arith.constant 0 : index
    %35 = vector.load %arg12[%c0_30, %c0_31] : memref<1x400xf32, #tpu.memory_space<vmem>>, vector<1x400xf32>
    %36 = vector.broadcast %35 : vector<1x400xf32> to vector<8x400xf32>
    %37 = arith.addf %34, %36 : vector<8x400xf32>
    %c0_32 = arith.constant 0 : index
    %c0_33 = arith.constant 0 : index
    %38 = vector.load %arg19[%c0_32, %c0_33] : memref<8x400xf32, #tpu.memory_space<vmem>>, vector<8x400xf32>
    tpu.vector_store %arg19[%c0_32, %c0_33], %37 {strides = array<i32>} : memref<8x400xf32, #tpu.memory_space<vmem>>, vector<8x400xf32>,
    %c0_34 = arith.constant 0 : index
    %c0_35 = arith.constant 0 : index
    %39 = vector.load %arg13[%c0_34, %c0_35] : memref<128x128xf32, #tpu.memory_space<vmem>>, vector<128x128xf32>
    %cst_36 = arith.constant dense<0.000000e+00> : vector<8x128xf32>
    %40 = tpu.matmul %10, %39, %cst_36 {dimension_numbers = #tpu.dot_dimension_numbers<[1], [0], [0], [1], [0, 0, 1, 1], [], []>} : vector<8x128xf32>, vector<128x128xf32>, vector<8x128xf32> -> vector<8x128xf32>
    %c0_37 = arith.constant 0 : index
    %c0_38 = arith.constant 0 : index
    %41 = vector.load %arg14[%c0_37, %c0_38] : memref<1x128xf32, #tpu.memory_space<vmem>>, vector<1x128xf32>
    %42 = vector.broadcast %41 : vector<1x128xf32> to vector<8x128xf32>
    %43 = arith.addf %40, %42 : vector<8x128xf32>
    %cst_39 = arith.constant 0.000000e+00 : f32
    %44 = vector.broadcast %cst_39 : f32 to vector<8x128xf32>
    %45 = arith.maximumf %43, %44 : vector<8x128xf32>
    %c0_40 = arith.constant 0 : index
    %c0_41 = arith.constant 0 : index
    %46 = vector.load %arg15[%c0_40, %c0_41] : memref<128x400xf32, #tpu.memory_space<vmem>>, vector<128x400xf32>
    %cst_42 = arith.constant dense<0.000000e+00> : vector<8x400xf32>
    %47 = tpu.matmul %45, %46, %cst_42 {dimension_numbers = #tpu.dot_dimension_numbers<[1], [0], [0], [1], [0, 0, 1, 1], [], []>} : vector<8x128xf32>, vector<128x400xf32>, vector<8x400xf32> -> vector<8x400xf32>
    %c0_43 = arith.constant 0 : index
    %c0_44 = arith.constant 0 : index
    %48 = vector.load %arg16[%c0_43, %c0_44] : memref<1x400xf32, #tpu.memory_space<vmem>>, vector<1x400xf32>
    %49 = vector.broadcast %48 : vector<1x400xf32> to vector<8x400xf32>
    %50 = arith.addf %47, %49 : vector<8x400xf32>
    %51 = vector.extract_strided_slice %50 {offsets = [0, 0], sizes = [8, 100], strides = [1, 1]} : vector<8x400xf32> to vector<8x100xf32>
    %c0_45 = arith.constant 0 : index
    %c0_46 = arith.constant 0 : index
    %52 = vector.load %arg20[%c0_45, %c0_46] : memref<8x100xf32, #tpu.memory_space<vmem>>, vector<8x100xf32>
    tpu.vector_store %arg20[%c0_45, %c0_46], %51 {strides = array<i32>} : memref<8x100xf32, #tpu.memory_space<vmem>>, vector<8x100xf32>,
    %53 = arith.mulf %37, %50 : vector<8x400xf32>
    %c0_47 = arith.constant 0 : index
    %c0_48 = arith.constant 0 : index
    %54 = vector.load %arg17[%c0_47, %c0_48] : memref<400x4xf32, #tpu.memory_space<vmem>>, vector<400x4xf32>
    %cst_49 = arith.constant dense<0.000000e+00> : vector<8x4xf32>
    %55 = tpu.matmul %53, %54, %cst_49 {dimension_numbers = #tpu.dot_dimension_numbers<[1], [0], [0], [1], [0, 0, 1, 1], [], []>} : vector<8x400xf32>, vector<400x4xf32>, vector<8x4xf32> -> vector<8x4xf32>
    %c0_50 = arith.constant 0 : index
    %c0_51 = arith.constant 0 : index
    %56 = vector.load %arg18[%c0_50, %c0_51] : memref<8x4xf32, #tpu.memory_space<vmem>>, vector<8x4xf32>
    tpu.vector_store %arg18[%c0_50, %c0_51], %55 {strides = array<i32>} : memref<8x4xf32, #tpu.memory_space<vmem>>, vector<8x4xf32>,
    return
  }
  func.func @transform_0(%arg0: i32) -> (i32, i32) {
    %c0_i32 = arith.constant 0 : i32
    %c0_i32_0 = arith.constant 0 : i32
    return %arg0, %c0_i32 : i32, i32
  }
  func.func @transform_1(%arg0: i32) -> (i32, i32) {
    %c0_i32 = arith.constant 0 : i32
    %c0_i32_0 = arith.constant 0 : i32
    %c0_i32_1 = arith.constant 0 : i32
    return %c0_i32, %c0_i32_0 : i32, i32
  }
  func.func @transform_2(%arg0: i32) -> (i32, i32) {
    %c0_i32 = arith.constant 0 : i32
    %c0_i32_0 = arith.constant 0 : i32
    %c0_i32_1 = arith.constant 0 : i32
    return %c0_i32, %c0_i32_0 : i32, i32
  }
  func.func @transform_3(%arg0: i32) -> (i32, i32) {
    %c0_i32 = arith.constant 0 : i32
    %c0_i32_0 = arith.constant 0 : i32
    %c0_i32_1 = arith.constant 0 : i32
    return %c0_i32, %c0_i32_0 : i32, i32
  }
  func.func @transform_4(%arg0: i32) -> (i32, i32) {
    %c0_i32 = arith.constant 0 : i32
    %c0_i32_0 = arith.constant 0 : i32
    %c0_i32_1 = arith.constant 0 : i32
    return %c0_i32, %c0_i32_0 : i32, i32
  }
  func.func @transform_5(%arg0: i32) -> (i32, i32) {
    %c0_i32 = arith.constant 0 : i32
    %c0_i32_0 = arith.constant 0 : i32
    %c0_i32_1 = arith.constant 0 : i32
    return %c0_i32, %c0_i32_0 : i32, i32
  }
  func.func @transform_6(%arg0: i32) -> (i32, i32) {
    %c0_i32 = arith.constant 0 : i32
    %c0_i32_0 = arith.constant 0 : i32
    %c0_i32_1 = arith.constant 0 : i32
    return %c0_i32, %c0_i32_0 : i32, i32
  }
  func.func @transform_7(%arg0: i32) -> (i32, i32) {
    %c0_i32 = arith.constant 0 : i32
    %c0_i32_0 = arith.constant 0 : i32
    %c0_i32_1 = arith.constant 0 : i32
    return %c0_i32, %c0_i32_0 : i32, i32
  }
  func.func @transform_8(%arg0: i32) -> (i32, i32) {
    %c0_i32 = arith.constant 0 : i32
    %c0_i32_0 = arith.constant 0 : i32
    %c0_i32_1 = arith.constant 0 : i32
    return %c0_i32, %c0_i32_0 : i32, i32
  }
  func.func @transform_9(%arg0: i32) -> (i32, i32) {
    %c0_i32 = arith.constant 0 : i32
    %c0_i32_0 = arith.constant 0 : i32
    %c0_i32_1 = arith.constant 0 : i32
    return %c0_i32, %c0_i32_0 : i32, i32
  }
  func.func @transform_10(%arg0: i32) -> (i32, i32) {
    %c0_i32 = arith.constant 0 : i32
    %c0_i32_0 = arith.constant 0 : i32
    %c0_i32_1 = arith.constant 0 : i32
    return %c0_i32, %c0_i32_0 : i32, i32
  }
  func.func @transform_11(%arg0: i32) -> (i32, i32) {
    %c0_i32 = arith.constant 0 : i32
    %c0_i32_0 = arith.constant 0 : i32
    %c0_i32_1 = arith.constant 0 : i32
    return %c0_i32, %c0_i32_0 : i32, i32
  }
  func.func @transform_12(%arg0: i32) -> (i32, i32) {
    %c0_i32 = arith.constant 0 : i32
    %c0_i32_0 = arith.constant 0 : i32
    %c0_i32_1 = arith.constant 0 : i32
    return %c0_i32, %c0_i32_0 : i32, i32
  }
  func.func @transform_13(%arg0: i32) -> (i32, i32) {
    %c0_i32 = arith.constant 0 : i32
    %c0_i32_0 = arith.constant 0 : i32
    %c0_i32_1 = arith.constant 0 : i32
    return %c0_i32, %c0_i32_0 : i32, i32
  }
  func.func @transform_14(%arg0: i32) -> (i32, i32) {
    %c0_i32 = arith.constant 0 : i32
    %c0_i32_0 = arith.constant 0 : i32
    %c0_i32_1 = arith.constant 0 : i32
    return %c0_i32, %c0_i32_0 : i32, i32
  }
  func.func @transform_15(%arg0: i32) -> (i32, i32) {
    %c0_i32 = arith.constant 0 : i32
    %c0_i32_0 = arith.constant 0 : i32
    %c0_i32_1 = arith.constant 0 : i32
    return %c0_i32, %c0_i32_0 : i32, i32
  }
  func.func @transform_16(%arg0: i32) -> (i32, i32) {
    %c0_i32 = arith.constant 0 : i32
    %c0_i32_0 = arith.constant 0 : i32
    %c0_i32_1 = arith.constant 0 : i32
    return %c0_i32, %c0_i32_0 : i32, i32
  }
  func.func @transform_17(%arg0: i32) -> (i32, i32) {
    %c0_i32 = arith.constant 0 : i32
    %c0_i32_0 = arith.constant 0 : i32
    return %arg0, %c0_i32 : i32, i32
  }
  func.func @transform_18(%arg0: i32) -> (i32, i32) {
    %c0_i32 = arith.constant 0 : i32
    %c0_i32_0 = arith.constant 0 : i32
    return %arg0, %c0_i32 : i32, i32
  }
  func.func @transform_19(%arg0: i32) -> (i32, i32) {
    %c0_i32 = arith.constant 0 : i32
    %c0_i32_0 = arith.constant 0 : i32
    return %arg0, %c0_i32 : i32, i32
  }
  func.func @transform_20(%arg0: i32) -> (i32, i32) {
    %c0_i32 = arith.constant 0 : i32
    %c0_i32_0 = arith.constant 0 : i32
    return %arg0, %c0_i32 : i32, i32
  }
}

</mosaic_0001>

<llo_original>
// kernel: state_goal_rbf_usf.1
$region0: #{state_goal_rbf_usf.1}
  #allocation0 [shape = 'u32[]', space=smem, size = 0x4, offset = 0x4, fixed_abs, tag = 'smem constant byte address 0x4 - core index']
  #allocation1 [shape = 'u32[72,128]{1,0:T(1,128)}', space=vmem, size = 0x9000, scoped, tag = 'internal scratch']
  %s0 = inlined_call_operand.vmem [shape: f32[8,32], index: 0, kind: input, shape index: {}]
  %s1 = inlined_call_operand.vmem [shape: f32[32,384], index: 1, kind: input, shape index: {}]
  %s2 = inlined_call_operand.vmem [shape: f32[1,384], index: 2, kind: input, shape index: {}]
  %s3 = inlined_call_operand.vmem [shape: f32[128,128], index: 3, kind: input, shape index: {}]
  %s4 = inlined_call_operand.vmem [shape: f32[1,128], index: 4, kind: input, shape index: {}]
  %s5 = inlined_call_operand.vmem [shape: f32[128,128], index: 5, kind: input, shape index: {}]
  %s6 = inlined_call_operand.vmem [shape: f32[1,128], index: 6, kind: input, shape index: {}]
  %s7 = inlined_call_operand.vmem [shape: f32[128,256], index: 7, kind: input, shape index: {}]
  %s8 = inlined_call_operand.vmem [shape: f32[128,256], index: 8, kind: input, shape index: {}]
  %s9 = inlined_call_operand.vmem [shape: f32[1,256], index: 9, kind: input, shape index: {}]
  %s10 = inlined_call_operand.vmem [shape: f32[256,400], index: 10, kind: input, shape index: {}]
  %s11 = inlined_call_operand.vmem [shape: f32[1,400], index: 11, kind: input, shape index: {}]
  %s12 = inlined_call_operand.vmem [shape: f32[128,128], index: 12, kind: input, shape index: {}]
  %s13 = inlined_call_operand.vmem [shape: f32[1,128], index: 13, kind: input, shape index: {}]
  %s14 = inlined_call_operand.vmem [shape: f32[128,400], index: 14, kind: input, shape index: {}]
  %s15 = inlined_call_operand.vmem [shape: f32[1,400], index: 15, kind: input, shape index: {}]
  %s16 = inlined_call_operand.vmem [shape: f32[400,4], index: 16, kind: input, shape index: {}]
  %s17 = inlined_call_operand.vmem [shape: f32[8,4], index: 17, kind: output, shape index: {0}]
  %s18 = inlined_call_operand.vmem [shape: f32[8,400], index: 18, kind: output, shape index: {1}]
  %s19 = inlined_call_operand.hbm [shape: f32[8,100], index: 19, kind: output, shape index: {2}]
  %s20 = inlined_call_operand.hbm [shape: f32[8,100], index: 20, kind: output, shape index: {3}]
  %21 = xla_tuple %s17, %s18, %s19, %s20
  %s22 = sld [smem:[#allocation0]]
  $region102: #{state_goal_rbf_usf.1} parent=0
    _
  %s24 = ssub.s32 1, %s22
  %s25 = scalar_select 0, %s24, %s22
  $region1: #{state_goal_rbf_usf.1} parent=0
    #allocation2 [shape = 'u8[4096]{0}', space=vmem, size = 0x1000, scoped, tag = 'output window, operand 2, single buffered']
    #allocation3 [shape = 's32[1]{0}', space=sflag, size = 0x4, scoped, tag = 'scoped memory for state_goal_rbf_usf.1']
    #allocation4 [shape = 'u8[4096]{0}', space=vmem, size = 0x1000, scoped, tag = 'output window, operand 3, single buffered']
    #allocation5 [shape = 's32[1]{0}', space=sflag, size = 0x4, scoped, tag = 'scoped memory for state_goal_rbf_usf.1']
    %26 = vsyncpa [#allocation3], 0
    %27 = vsyncpa [#allocation5], 0
    // Predicated region
    $region2: #{state_goal_rbf_usf.1} parent=1 // pred_check
      _
    $region3: #{state_goal_rbf_usf.1} parent=1 // pred_check_branch
      %29 = sbr.rel (0) target = $region5
    $region4: #{state_goal_rbf_usf.1} parent=1 // pred_region
      _
    $region5: #{state_goal_rbf_usf.1} parent=1 // pred_fallthru
      _
    // Predicated region
    $region6: #{state_goal_rbf_usf.1} parent=1 // pred_check
      _
    $region7: #{state_goal_rbf_usf.1} parent=1 // pred_check_branch
      %31 = sbr.rel (0) target = $region9
    $region8: #{state_goal_rbf_usf.1} parent=1 // pred_region
      _
    $region9: #{state_goal_rbf_usf.1} parent=1 // pred_fallthru
      _
    // Predicated region
    $region10: #{state_goal_rbf_usf.1} parent=1 // pred_check
      _
    $region11: #{state_goal_rbf_usf.1} parent=1 // pred_check_branch
      %33 = sbr.rel (0) target = $region13
    $region12: #{state_goal_rbf_usf.1} parent=1 // pred_region
      _
    $region13: #{state_goal_rbf_usf.1} parent=1 // pred_fallthru
      _
    // Predicated region
    $region14: #{state_goal_rbf_usf.1} parent=1 // pred_check
      _
    $region15: #{state_goal_rbf_usf.1} parent=1 // pred_check_branch
      %35 = sbr.rel (0) target = $region17
    $region16: #{state_goal_rbf_usf.1} parent=1 // pred_region
      _
    $region17: #{state_goal_rbf_usf.1} parent=1 // pred_fallthru
      _
    // Predicated region
    $region18: #{state_goal_rbf_usf.1} parent=1 // pred_check
      _
    $region19: #{state_goal_rbf_usf.1} parent=1 // pred_check_branch
      %37 = sbr.rel (0) target = $region21
    $region20: #{state_goal_rbf_usf.1} parent=1 // pred_region
      _
    $region21: #{state_goal_rbf_usf.1} parent=1 // pred_fallthru
      _
    // Predicated region
    $region22: #{state_goal_rbf_usf.1} parent=1 // pred_check
      _
    $region23: #{state_goal_rbf_usf.1} parent=1 // pred_check_branch
      %39 = sbr.rel (0) target = $region25
    $region24: #{state_goal_rbf_usf.1} parent=1 // pred_region
      _
    $region25: #{state_goal_rbf_usf.1} parent=1 // pred_fallthru
      _
    // Predicated region
    $region26: #{state_goal_rbf_usf.1} parent=1 // pred_check
      _
    $region27: #{state_goal_rbf_usf.1} parent=1 // pred_check_branch
      %41 = sbr.rel (0) target = $region29
    $region28: #{state_goal_rbf_usf.1} parent=1 // pred_region
      _
    $region29: #{state_goal_rbf_usf.1} parent=1 // pred_fallthru
      _
    // Predicated region
    $region30: #{state_goal_rbf_usf.1} parent=1 // pred_check
      _
    $region31: #{state_goal_rbf_usf.1} parent=1 // pred_check_branch
      %43 = sbr.rel (0) target = $region33
    $region32: #{state_goal_rbf_usf.1} parent=1 // pred_region
      _
    $region33: #{state_goal_rbf_usf.1} parent=1 // pred_fallthru
      _
    // Predicated region
    $region34: #{state_goal_rbf_usf.1} parent=1 // pred_check
      _
    $region35: #{state_goal_rbf_usf.1} parent=1 // pred_check_branch
      %45 = sbr.rel (0) target = $region37
    $region36: #{state_goal_rbf_usf.1} parent=1 // pred_region
      _
    $region37: #{state_goal_rbf_usf.1} parent=1 // pred_fallthru
      _
    // Predicated region
    $region38: #{state_goal_rbf_usf.1} parent=1 // pred_check
      _
    $region39: #{state_goal_rbf_usf.1} parent=1 // pred_check_branch
      %47 = sbr.rel (0) target = $region41
    $region40: #{state_goal_rbf_usf.1} parent=1 // pred_region
      _
    $region41: #{state_goal_rbf_usf.1} parent=1 // pred_fallthru
      _
    // Predicated region
    $region42: #{state_goal_rbf_usf.1} parent=1 // pred_check
      _
    $region43: #{state_goal_rbf_usf.1} parent=1 // pred_check_branch
      %49 = sbr.rel (0) target = $region45
    $region44: #{state_goal_rbf_usf.1} parent=1 // pred_region
      _
    $region45: #{state_goal_rbf_usf.1} parent=1 // pred_fallthru
      _
    // Predicated region
    $region46: #{state_goal_rbf_usf.1} parent=1 // pred_check
      _
    $region47: #{state_goal_rbf_usf.1} parent=1 // pred_check_branch
      %51 = sbr.rel (0) target = $region49
    $region48: #{state_goal_rbf_usf.1} parent=1 // pred_region
      _
    $region49: #{state_goal_rbf_usf.1} parent=1 // pred_fallthru
      _
    // Predicated region
    $region50: #{state_goal_rbf_usf.1} parent=1 // pred_check
      _
    $region51: #{state_goal_rbf_usf.1} parent=1 // pred_check_branch
      %53 = sbr.rel (0) target = $region53
    $region52: #{state_goal_rbf_usf.1} parent=1 // pred_region
      _
    $region53: #{state_goal_rbf_usf.1} parent=1 // pred_fallthru
      _
    // Predicated region
    $region54: #{state_goal_rbf_usf.1} parent=1 // pred_check
      _
    $region55: #{state_goal_rbf_usf.1} parent=1 // pred_check_branch
      %55 = sbr.rel (0) target = $region57
    $region56: #{state_goal_rbf_usf.1} parent=1 // pred_region
      _
    $region57: #{state_goal_rbf_usf.1} parent=1 // pred_fallthru
      _
    // Predicated region
    $region58: #{state_goal_rbf_usf.1} parent=1 // pred_check
      _
    $region59: #{state_goal_rbf_usf.1} parent=1 // pred_check_branch
      %57 = sbr.rel (0) target = $region61
    $region60: #{state_goal_rbf_usf.1} parent=1 // pred_region
      _
    $region61: #{state_goal_rbf_usf.1} parent=1 // pred_fallthru
      _
    // Predicated region
    $region62: #{state_goal_rbf_usf.1} parent=1 // pred_check
      _
    $region63: #{state_goal_rbf_usf.1} parent=1 // pred_check_branch
      %59 = sbr.rel (0) target = $region65
    $region64: #{state_goal_rbf_usf.1} parent=1 // pred_region
      _
    $region65: #{state_goal_rbf_usf.1} parent=1 // pred_fallthru
      _
    // Predicated region
    $region66: #{state_goal_rbf_usf.1} parent=1 // pred_check
      _
    $region67: #{state_goal_rbf_usf.1} parent=1 // pred_check_branch
      %61 = sbr.rel (0) target = $region69
    $region68: #{state_goal_rbf_usf.1} parent=1 // pred_region
      _
    $region69: #{state_goal_rbf_usf.1} parent=1 // pred_fallthru
      _
    %v62 = vld [vmem:[%s0] sm:$0xff]
    %v63 = vld [vmem:[%s1] sm:$0xff]
    %v64 = vld [vmem:[%s1 + $0x8] sm:$0xff]
    %v65 = vld [vmem:[%s1 + $0x10] sm:$0xff]
    %v66 = vld [vmem:[%s1 + $0x18] sm:$0xff]
    %v67 = vld [vmem:[%s1 + $0x20] sm:$0xff]
    %v68 = vld [vmem:[%s1 + $0x28] sm:$0xff]
    %v69 = vld [vmem:[%s1 + $0x30] sm:$0xff]
    %v70 = vld [vmem:[%s1 + $0x38] sm:$0xff]
    %v71 = vld [vmem:[%s1 + $0x40] sm:$0xff]
    %v72 = vld [vmem:[%s1 + $0x48] sm:$0xff]
    %v73 = vld [vmem:[%s1 + $0x50] sm:$0xff]
    %v74 = vld [vmem:[%s1 + $0x58] sm:$0xff]
    %v75 = vld [vmem:[%s2] sm:$0x7]
    %v77 = vperm.slane %v75, 0
    %v78 = vperm.slane %v75, 1
    %v79 = vperm.slane %v75, 2
    %vm83 = vcmask 261120
    %v85 = vsel %vm83, %v62, 0
    %87 = vmatpush.msra.mxu0 0.0
    %88 = vmatpush.msra.mxu0 0.0
    %89 = vmatpush.msra.mxu0 0.0
    %90 = vmatpush.msra.mxu0 0.0
    %91 = vmatpush.msra.mxu0 0.0
    %92 = vmatpush.msra.mxu0 0.0
    %93 = vmatpush.msra.mxu0 0.0
    %94 = vmatpush.msra.mxu0 0.0
    %95 = vmatpush.msra.mxu0 0.0
    %96 = vmatpush.msra.mxu0 0.0
    %97 = vmatpush.msra.mxu0 0.0
    %98 = vmatpush.msra.mxu0 0.0
    %99 = vmatpush.msra.mxu0 %v72
    %100 = vmatpush.msra.mxu0 %v69
    %101 = vmatpush.msra.mxu0 %v66
    %102 = vmatpush.msra.mxu0 %v63
    %103 = vmatmul.f32.gmra.mxu0 %v85
    %v104 = vpop.f32.mrf.mxu0
    %v105 = vadd.f32 %v77, %v104
    %106 = vdwg.mxu0
    %107 = vmatpush.msra.mxu0 0.0
    %108 = vmatpush.msra.mxu0 0.0
    %109 = vmatpush.msra.mxu0 0.0
    %110 = vmatpush.msra.mxu0 0.0
    %111 = vmatpush.msra.mxu0 0.0
    %112 = vmatpush.msra.mxu0 0.0
    %113 = vmatpush.msra.mxu0 0.0
    %114 = vmatpush.msra.mxu0 0.0
    %115 = vmatpush.msra.mxu0 0.0
    %116 = vmatpush.msra.mxu0 0.0
    %117 = vmatpush.msra.mxu0 0.0
    %118 = vmatpush.msra.mxu0 0.0
    %119 = vmatpush.msra.mxu0 %v73
    %120 = vmatpush.msra.mxu0 %v70
    %121 = vmatpush.msra.mxu0 %v67
    %122 = vmatpush.msra.mxu0 %v64
    %123 = vmatmul.f32.gmra.mxu0 %v85
    %v124 = vpop.f32.mrf.mxu0
    %v125 = vadd.f32 %v78, %v124
    %126 = vdwg.mxu0
    %127 = vmatpush.msra.mxu0 0.0
    %128 = vmatpush.msra.mxu0 0.0
    %129 = vmatpush.msra.mxu0 0.0
    %130 = vmatpush.msra.mxu0 0.0
    %131 = vmatpush.msra.mxu0 0.0
    %132 = vmatpush.msra.mxu0 0.0
    %133 = vmatpush.msra.mxu0 0.0
    %134 = vmatpush.msra.mxu0 0.0
    %135 = vmatpush.msra.mxu0 0.0
    %136 = vmatpush.msra.mxu0 0.0
    %137 = vmatpush.msra.mxu0 0.0
    %138 = vmatpush.msra.mxu0 0.0
    %139 = vmatpush.msra.mxu0 %v74
    %140 = vmatpush.msra.mxu0 %v71
    %141 = vmatpush.msra.mxu0 %v68
    %142 = vmatpush.msra.mxu0 %v65
    %143 = vmatmul.f32.gmra.mxu0 %v85
    %v144 = vpop.f32.mrf.mxu0
    %v145 = vadd.f32 %v79, %v144
    %146 = vdwg.mxu0
    %v147 = vmax.f32 %v105, 0.0
    %v148 = vmax.f32 %v125, 0.0
    %v149 = vmax.f32 %v145, 0.0
    %v150 = vld [vmem:[%s3] sm:$0xff]
    %v151 = vld [vmem:[%s3 + $0x8] sm:$0xff]
    %v152 = vld [vmem:[%s3 + $0x10] sm:$0xff]
    %v153 = vld [vmem:[%s3 + $0x18] sm:$0xff]
    %v154 = vld [vmem:[%s3 + $0x20] sm:$0xff]
    %v155 = vld [vmem:[%s3 + $0x28] sm:$0xff]
    %v156 = vld [vmem:[%s3 + $0x30] sm:$0xff]
    %v157 = vld [vmem:[%s3 + $0x38] sm:$0xff]
    %v158 = vld [vmem:[%s3 + $0x40] sm:$0xff]
    %v159 = vld [vmem:[%s3 + $0x48] sm:$0xff]
    %v160 = vld [vmem:[%s3 + $0x50] sm:$0xff]
    %v161 = vld [vmem:[%s3 + $0x58] sm:$0xff]
    %v162 = vld [vmem:[%s3 + $0x60] sm:$0xff]
    %v163 = vld [vmem:[%s3 + $0x68] sm:$0xff]
    %v164 = vld [vmem:[%s3 + $0x70] sm:$0xff]
    %v165 = vld [vmem:[%s3 + $0x78] sm:$0xff]
    %v166 = vld [vmem:[%s4] sm:$0x1]
    %v168 = vperm.slane %v166, 0
    %170 = vmatpush.msra.mxu0 %v165
    %171 = vmatpush.msra.mxu0 %v164
    %172 = vmatpush.msra.mxu0 %v163
    %173 = vmatpush.msra.mxu0 %v162
    %174 = vmatpush.msra.mxu0 %v161
    %175 = vmatpush.msra.mxu0 %v160
    %176 = vmatpush.msra.mxu0 %v159
    %177 = vmatpush.msra.mxu0 %v158
    %178 = vmatpush.msra.mxu0 %v157
    %179 = vmatpush.msra.mxu0 %v156
    %180 = vmatpush.msra.mxu0 %v155
    %181 = vmatpush.msra.mxu0 %v154
    %182 = vmatpush.msra.mxu0 %v153
    %183 = vmatpush.msra.mxu0 %v152
    %184 = vmatpush.msra.mxu0 %v151
    %185 = vmatpush.msra.mxu0 %v150
    %186 = vmatmul.f32.gmra.mxu0 %v147
    %v187 = vpop.f32.mrf.mxu0
    %v188 = vadd.f32 %v168, %v187
    %189 = vdwg.mxu0
    %vm190 = vcmask 818176
    %191 = vst.msk [vmem:[#allocation4] sm:$0xff] %vm190, %v188
    %v192 = vld [vmem:[%s5] sm:$0xff]
    %v193 = vld [vmem:[%s5 + $0x8] sm:$0xff]
    %v194 = vld [vmem:[%s5 + $0x10] sm:$0xff]
    %v195 = vld [vmem:[%s5 + $0x18] sm:$0xff]
    %v196 = vld [vmem:[%s5 + $0x20] sm:$0xff]
    %v197 = vld [vmem:[%s5 + $0x28] sm:$0xff]
    %v198 = vld [vmem:[%s5 + $0x30] sm:$0xff]
    %v199 = vld [vmem:[%s5 + $0x38] sm:$0xff]
    %v200 = vld [vmem:[%s5 + $0x40] sm:$0xff]
    %v201 = vld [vmem:[%s5 + $0x48] sm:$0xff]
    %v202 = vld [vmem:[%s5 + $0x50] sm:$0xff]
    %v203 = vld [vmem:[%s5 + $0x58] sm:$0xff]
    %v204 = vld [vmem:[%s5 + $0x60] sm:$0xff]
    %v205 = vld [vmem:[%s5 + $0x68] sm:$0xff]
    %v206 = vld [vmem:[%s5 + $0x70] sm:$0xff]
    %v207 = vld [vmem:[%s5 + $0x78] sm:$0xff]
    %v208 = vld [vmem:[%s6] sm:$0x1]
    %v210 = vperm.slane %v208, 0
    %212 = vmatpush.msra.mxu0 %v207
    %213 = vmatpush.msra.mxu0 %v206
    %214 = vmatpush.msra.mxu0 %v205
    %215 = vmatpush.msra.mxu0 %v204
    %216 = vmatpush.msra.mxu0 %v203
    %217 = vmatpush.msra.mxu0 %v202
    %218 = vmatpush.msra.mxu0 %v201
    %219 = vmatpush.msra.mxu0 %v200
    %220 = vmatpush.msra.mxu0 %v199
    %221 = vmatpush.msra.mxu0 %v198
    %222 = vmatpush.msra.mxu0 %v197
    %223 = vmatpush.msra.mxu0 %v196
    %224 = vmatpush.msra.mxu0 %v195
    %225 = vmatpush.msra.mxu0 %v194
    %226 = vmatpush.msra.mxu0 %v193
    %227 = vmatpush.msra.mxu0 %v192
    %228 = vmatmul.f32.gmra.mxu0 %v148
    %v229 = vpop.f32.mrf.mxu0
    %v230 = vadd.f32 %v210, %v229
    %231 = vdwg.mxu0
    %v232 = vld [vmem:[%s7] sm:$0xff]
    %v233 = vld [vmem:[%s7 + $0x8] sm:$0xff]
    %v234 = vld [vmem:[%s7 + $0x10] sm:$0xff]
    %v235 = vld [vmem:[%s7 + $0x18] sm:$0xff]
    %v236 = vld [vmem:[%s7 + $0x20] sm:$0xff]
    %v237 = vld [vmem:[%s7 + $0x28] sm:$0xff]
    %v238 = vld [vmem:[%s7 + $0x30] sm:$0xff]
    %v239 = vld [vmem:[%s7 + $0x38] sm:$0xff]
    %v240 = vld [vmem:[%s7 + $0x40] sm:$0xff]
    %v241 = vld [vmem:[%s7 + $0x48] sm:$0xff]
    %v242 = vld [vmem:[%s7 + $0x50] sm:$0xff]
    %v243 = vld [vmem:[%s7 + $0x58] sm:$0xff]
    %v244 = vld [vmem:[%s7 + $0x60] sm:$0xff]
    %v245 = vld [vmem:[%s7 + $0x68] sm:$0xff]
    %v246 = vld [vmem:[%s7 + $0x70] sm:$0xff]
    %v247 = vld [vmem:[%s7 + $0x78] sm:$0xff]
    %v248 = vld [vmem:[%s7 + $0x80] sm:$0xff]
    %v249 = vld [vmem:[%s7 + $0x88] sm:$0xff]
    %v250 = vld [vmem:[%s7 + $0x90] sm:$0xff]
    %v251 = vld [vmem:[%s7 + $0x98] sm:$0xff]
    %v252 = vld [vmem:[%s7 + $0xa0] sm:$0xff]
    %v253 = vld [vmem:[%s7 + $0xa8] sm:$0xff]
    %v254 = vld [vmem:[%s7 + $0xb0] sm:$0xff]
    %v255 = vld [vmem:[%s7 + $0xb8] sm:$0xff]
    %v256 = vld [vmem:[%s7 + $0xc0] sm:$0xff]
    %v257 = vld [vmem:[%s7 + $0xc8] sm:$0xff]
    %v258 = vld [vmem:[%s7 + $0xd0] sm:$0xff]
    %v259 = vld [vmem:[%s7 + $0xd8] sm:$0xff]
    %v260 = vld [vmem:[%s7 + $0xe0] sm:$0xff]
    %v261 = vld [vmem:[%s7 + $0xe8] sm:$0xff]
    %v262 = vld [vmem:[%s7 + $0xf0] sm:$0xff]
    %v263 = vld [vmem:[%s7 + $0xf8] sm:$0xff]
    %v264 = vld [vmem:[%s8] sm:$0xff]
    %v265 = vld [vmem:[%s8 + $0x8] sm:$0xff]
    %v266 = vld [vmem:[%s8 + $0x10] sm:$0xff]
    %v267 = vld [vmem:[%s8 + $0x18] sm:$0xff]
    %v268 = vld [vmem:[%s8 + $0x20] sm:$0xff]
    %v269 = vld [vmem:[%s8 + $0x28] sm:$0xff]
    %v270 = vld [vmem:[%s8 + $0x30] sm:$0xff]
    %v271 = vld [vmem:[%s8 + $0x38] sm:$0xff]
    %v272 = vld [vmem:[%s8 + $0x40] sm:$0xff]
    %v273 = vld [vmem:[%s8 + $0x48] sm:$0xff]
    %v274 = vld [vmem:[%s8 + $0x50] sm:$0xff]
    %v275 = vld [vmem:[%s8 + $0x58] sm:$0xff]
    %v276 = vld [vmem:[%s8 + $0x60] sm:$0xff]
    %v277 = vld [vmem:[%s8 + $0x68] sm:$0xff]
    %v278 = vld [vmem:[%s8 + $0x70] sm:$0xff]
    %v279 = vld [vmem:[%s8 + $0x78] sm:$0xff]
    %v280 = vld [vmem:[%s8 + $0x80] sm:$0xff]
    %v281 = vld [vmem:[%s8 + $0x88] sm:$0xff]
    %v282 = vld [vmem:[%s8 + $0x90] sm:$0xff]
    %v283 = vld [vmem:[%s8 + $0x98] sm:$0xff]
    %v284 = vld [vmem:[%s8 + $0xa0] sm:$0xff]
    %v285 = vld [vmem:[%s8 + $0xa8] sm:$0xff]
    %v286 = vld [vmem:[%s8 + $0xb0] sm:$0xff]
    %v287 = vld [vmem:[%s8 + $0xb8] sm:$0xff]
    %v288 = vld [vmem:[%s8 + $0xc0] sm:$0xff]
    %v289 = vld [vmem:[%s8 + $0xc8] sm:$0xff]
    %v290 = vld [vmem:[%s8 + $0xd0] sm:$0xff]
    %v291 = vld [vmem:[%s8 + $0xd8] sm:$0xff]
    %v292 = vld [vmem:[%s8 + $0xe0] sm:$0xff]
    %v293 = vld [vmem:[%s8 + $0xe8] sm:$0xff]
    %v294 = vld [vmem:[%s8 + $0xf0] sm:$0xff]
    %v295 = vld [vmem:[%s8 + $0xf8] sm:$0xff]
    %296 = vmatpush.msra.mxu0 %v294
    %297 = vmatpush.msra.mxu0 %v292
    %298 = vmatpush.msra.mxu0 %v290
    %299 = vmatpush.msra.mxu0 %v288
    %300 = vmatpush.msra.mxu0 %v286
    %301 = vmatpush.msra.mxu0 %v284
    %302 = vmatpush.msra.mxu0 %v282
    %303 = vmatpush.msra.mxu0 %v280
    %304 = vmatpush.msra.mxu0 %v278
    %305 = vmatpush.msra.mxu0 %v276
    %306 = vmatpush.msra.mxu0 %v274
    %307 = vmatpush.msra.mxu0 %v272
    %308 = vmatpush.msra.mxu0 %v270
    %309 = vmatpush.msra.mxu0 %v268
    %310 = vmatpush.msra.mxu0 %v266
    %311 = vmatpush.msra.mxu0 %v264
    %312 = vmatmul.f32.gmra.mxu0 %v230
    %v313 = vpop.f32.mrf.mxu0
    %v314 = vadd.f32 0.0, %v313
    %315 = vdwg.mxu0
    %316 = vmatpush.msra.mxu0 %v295
    %317 = vmatpush.msra.mxu0 %v293
    %318 = vmatpush.msra.mxu0 %v291
    %319 = vmatpush.msra.mxu0 %v289
    %320 = vmatpush.msra.mxu0 %v287
    %321 = vmatpush.msra.mxu0 %v285
    %322 = vmatpush.msra.mxu0 %v283
    %323 = vmatpush.msra.mxu0 %v281
    %324 = vmatpush.msra.mxu0 %v279
    %325 = vmatpush.msra.mxu0 %v277
    %326 = vmatpush.msra.mxu0 %v275
    %327 = vmatpush.msra.mxu0 %v273
    %328 = vmatpush.msra.mxu0 %v271
    %329 = vmatpush.msra.mxu0 %v269
    %330 = vmatpush.msra.mxu0 %v267
    %331 = vmatpush.msra.mxu0 %v265
    %332 = vmatmul.f32.gmra.mxu0 %v230
    %v333 = vpop.f32.mrf.mxu0
    %v334 = vadd.f32 0.0, %v333
    %335 = vdwg.mxu0
    %336 = vmatpush.msra.mxu0 %v262
    %337 = vmatpush.msra.mxu0 %v260
    %338 = vmatpush.msra.mxu0 %v258
    %339 = vmatpush.msra.mxu0 %v256
    %340 = vmatpush.msra.mxu0 %v254
    %341 = vmatpush.msra.mxu0 %v252
    %342 = vmatpush.msra.mxu0 %v250
    %343 = vmatpush.msra.mxu0 %v248
    %344 = vmatpush.msra.mxu0 %v246
    %345 = vmatpush.msra.mxu0 %v244
    %346 = vmatpush.msra.mxu0 %v242
    %347 = vmatpush.msra.mxu0 %v240
    %348 = vmatpush.msra.mxu0 %v238
    %349 = vmatpush.msra.mxu0 %v236
    %350 = vmatpush.msra.mxu0 %v234
    %351 = vmatpush.msra.mxu0 %v232
    %352 = vmatmul.f32.gmra.mxu0 %v188
    %v353 = vpop.f32.mrf.mxu0
    %v354 = vadd.f32 %v314, %v353
    %355 = vdwg.mxu0
    %356 = vmatpush.msra.mxu0 %v263
    %357 = vmatpush.msra.mxu0 %v261
    %358 = vmatpush.msra.mxu0 %v259
    %359 = vmatpush.msra.mxu0 %v257
    %360 = vmatpush.msra.mxu0 %v255
    %361 = vmatpush.msra.mxu0 %v253
    %362 = vmatpush.msra.mxu0 %v251
    %363 = vmatpush.msra.mxu0 %v249
    %364 = vmatpush.msra.mxu0 %v247
    %365 = vmatpush.msra.mxu0 %v245
    %366 = vmatpush.msra.mxu0 %v243
    %367 = vmatpush.msra.mxu0 %v241
    %368 = vmatpush.msra.mxu0 %v239
    %369 = vmatpush.msra.mxu0 %v237
    %370 = vmatpush.msra.mxu0 %v235
    %371 = vmatpush.msra.mxu0 %v233
    %372 = vmatmul.f32.gmra.mxu0 %v188
    %v373 = vpop.f32.mrf.mxu0
    %v374 = vadd.f32 %v334, %v373
    %375 = vdwg.mxu0
    %v376 = vld [vmem:[%s9] sm:$0x3]
    %v378 = vperm.slane %v376, 0
    %v379 = vperm.slane %v376, 1
    %v382 = vadd.f32 %v354, %v378
    %v383 = vadd.f32 %v374, %v379
    %v384 = vmax.f32 %v382, 0.0
    %v385 = vmax.f32 %v383, 0.0
    %v386 = vld [vmem:[%s10] sm:$0xff]
    %v387 = vld [vmem:[%s10 + $0x8] sm:$0xff]
    %v388 = vld [vmem:[%s10 + $0x10] sm:$0xff]
    %v389 = vld [vmem:[%s10 + $0x18] sm:$0xff]
    %v390 = vld [vmem:[%s10 + $0x20] sm:$0xff]
    %v391 = vld [vmem:[%s10 + $0x28] sm:$0xff]
    %v392 = vld [vmem:[%s10 + $0x30] sm:$0xff]
    %v393 = vld [vmem:[%s10 + $0x38] sm:$0xff]
    %v394 = vld [vmem:[%s10 + $0x40] sm:$0xff]
    %v395 = vld [vmem:[%s10 + $0x48] sm:$0xff]
    %v396 = vld [vmem:[%s10 + $0x50] sm:$0xff]
    %v397 = vld [vmem:[%s10 + $0x58] sm:$0xff]
    %v398 = vld [vmem:[%s10 + $0x60] sm:$0xff]
    %v399 = vld [vmem:[%s10 + $0x68] sm:$0xff]
    %v400 = vld [vmem:[%s10 + $0x70] sm:$0xff]
    %v401 = vld [vmem:[%s10 + $0x78] sm:$0xff]
    %v402 = vld [vmem:[%s10 + $0x80] sm:$0xff]
    %v403 = vld [vmem:[%s10 + $0x88] sm:$0xff]
    %v404 = vld [vmem:[%s10 + $0x90] sm:$0xff]
    %v405 = vld [vmem:[%s10 + $0x98] sm:$0xff]
    %v406 = vld [vmem:[%s10 + $0xa0] sm:$0xff]
    %v407 = vld [vmem:[%s10 + $0xa8] sm:$0xff]
    %v408 = vld [vmem:[%s10 + $0xb0] sm:$0xff]
    %v409 = vld [vmem:[%s10 + $0xb8] sm:$0xff]
    %v410 = vld [vmem:[%s10 + $0xc0] sm:$0xff]
    %v411 = vld [vmem:[%s10 + $0xc8] sm:$0xff]
    %v412 = vld [vmem:[%s10 + $0xd0] sm:$0xff]
    %v413 = vld [vmem:[%s10 + $0xd8] sm:$0xff]
    %v414 = vld [vmem:[%s10 + $0xe0] sm:$0xff]
    %v415 = vld [vmem:[%s10 + $0xe8] sm:$0xff]
    %v416 = vld [vmem:[%s10 + $0xf0] sm:$0xff]
    %v417 = vld [vmem:[%s10 + $0xf8] sm:$0xff]
    %v418 = vld [vmem:[%s10 + $0x100] sm:$0xff]
    %v419 = vld [vmem:[%s10 + $0x108] sm:$0xff]
    %v420 = vld [vmem:[%s10 + $0x110] sm:$0xff]
    %v421 = vld [vmem:[%s10 + $0x118] sm:$0xff]
    %v422 = vld [vmem:[%s10 + $0x120] sm:$0xff]
    %v423 = vld [vmem:[%s10 + $0x128] sm:$0xff]
    %v424 = vld [vmem:[%s10 + $0x130] sm:$0xff]
    %v425 = vld [vmem:[%s10 + $0x138] sm:$0xff]
    %v426 = vld [vmem:[%s10 + $0x140] sm:$0xff]
    %v427 = vld [vmem:[%s10 + $0x148] sm:$0xff]
    %v428 = vld [vmem:[%s10 + $0x150] sm:$0xff]
    %v429 = vld [vmem:[%s10 + $0x158] sm:$0xff]
    %v430 = vld [vmem:[%s10 + $0x160] sm:$0xff]
    %v431 = vld [vmem:[%s10 + $0x168] sm:$0xff]
    %v432 = vld [vmem:[%s10 + $0x170] sm:$0xff]
    %v433 = vld [vmem:[%s10 + $0x178] sm:$0xff]
    %v434 = vld [vmem:[%s10 + $0x180] sm:$0xff]
    %v435 = vld [vmem:[%s10 + $0x188] sm:$0xff]
    %v436 = vld [vmem:[%s10 + $0x190] sm:$0xff]
    %v437 = vld [vmem:[%s10 + $0x198] sm:$0xff]
    %v438 = vld [vmem:[%s10 + $0x1a0] sm:$0xff]
    %v439 = vld [vmem:[%s10 + $0x1a8] sm:$0xff]
    %v440 = vld [vmem:[%s10 + $0x1b0] sm:$0xff]
    %v441 = vld [vmem:[%s10 + $0x1b8] sm:$0xff]
    %v442 = vld [vmem:[%s10 + $0x1c0] sm:$0xff]
    %v443 = vld [vmem:[%s10 + $0x1c8] sm:$0xff]
    %v444 = vld [vmem:[%s10 + $0x1d0] sm:$0xff]
    %v445 = vld [vmem:[%s10 + $0x1d8] sm:$0xff]
    %v446 = vld [vmem:[%s10 + $0x1e0] sm:$0xff]
    %v447 = vld [vmem:[%s10 + $0x1e8] sm:$0xff]
    %v448 = vld [vmem:[%s10 + $0x1f0] sm:$0xff]
    %v449 = vld [vmem:[%s10 + $0x1f8] sm:$0xff]
    %v450 = vld [vmem:[%s10 + $0x200] sm:$0xff]
    %v451 = vld [vmem:[%s10 + $0x208] sm:$0xff]
    %v452 = vld [vmem:[%s10 + $0x210] sm:$0xff]
    %v453 = vld [vmem:[%s10 + $0x218] sm:$0xff]
    %v454 = vld [vmem:[%s10 + $0x220] sm:$0xff]
    %v455 = vld [vmem:[%s10 + $0x228] sm:$0xff]
    %v456 = vld [vmem:[%s10 + $0x230] sm:$0xff]
    %v457 = vld [vmem:[%s10 + $0x238] sm:$0xff]
    %v458 = vld [vmem:[%s10 + $0x240] sm:$0xff]
    %v459 = vld [vmem:[%s10 + $0x248] sm:$0xff]
    %v460 = vld [vmem:[%s10 + $0x250] sm:$0xff]
    %v461 = vld [vmem:[%s10 + $0x258] sm:$0xff]
    %v462 = vld [vmem:[%s10 + $0x260] sm:$0xff]
    %v463 = vld [vmem:[%s10 + $0x268] sm:$0xff]
    %v464 = vld [vmem:[%s10 + $0x270] sm:$0xff]
    %v465 = vld [vmem:[%s10 + $0x278] sm:$0xff]
    %v466 = vld [vmem:[%s10 + $0x280] sm:$0xff]
    %v467 = vld [vmem:[%s10 + $0x288] sm:$0xff]
    %v468 = vld [vmem:[%s10 + $0x290] sm:$0xff]
    %v469 = vld [vmem:[%s10 + $0x298] sm:$0xff]
    %v470 = vld [vmem:[%s10 + $0x2a0] sm:$0xff]
    %v471 = vld [vmem:[%s10 + $0x2a8] sm:$0xff]
    %v472 = vld [vmem:[%s10 + $0x2b0] sm:$0xff]
    %v473 = vld [vmem:[%s10 + $0x2b8] sm:$0xff]
    %v474 = vld [vmem:[%s10 + $0x2c0] sm:$0xff]
    %v475 = vld [vmem:[%s10 + $0x2c8] sm:$0xff]
    %v476 = vld [vmem:[%s10 + $0x2d0] sm:$0xff]
    %v477 = vld [vmem:[%s10 + $0x2d8] sm:$0xff]
    %v478 = vld [vmem:[%s10 + $0x2e0] sm:$0xff]
    %v479 = vld [vmem:[%s10 + $0x2e8] sm:$0xff]
    %v480 = vld [vmem:[%s10 + $0x2f0] sm:$0xff]
    %v481 = vld [vmem:[%s10 + $0x2f8] sm:$0xff]
    %v482 = vld [vmem:[%s10 + $0x300] sm:$0xff]
    %v483 = vld [vmem:[%s10 + $0x308] sm:$0xff]
    %v484 = vld [vmem:[%s10 + $0x310] sm:$0xff]
    %v485 = vld [vmem:[%s10 + $0x318] sm:$0xff]
    %v486 = vld [vmem:[%s10 + $0x320] sm:$0xff]
    %v487 = vld [vmem:[%s10 + $0x328] sm:$0xff]
    %v488 = vld [vmem:[%s10 + $0x330] sm:$0xff]
    %v489 = vld [vmem:[%s10 + $0x338] sm:$0xff]
    %v490 = vld [vmem:[%s10 + $0x340] sm:$0xff]
    %v491 = vld [vmem:[%s10 + $0x348] sm:$0xff]
    %v492 = vld [vmem:[%s10 + $0x350] sm:$0xff]
    %v493 = vld [vmem:[%s10 + $0x358] sm:$0xff]
    %v494 = vld [vmem:[%s10 + $0x360] sm:$0xff]
    %v495 = vld [vmem:[%s10 + $0x368] sm:$0xff]
    %v496 = vld [vmem:[%s10 + $0x370] sm:$0xff]
    %v497 = vld [vmem:[%s10 + $0x378] sm:$0xff]
    %v498 = vld [vmem:[%s10 + $0x380] sm:$0xff]
    %v499 = vld [vmem:[%s10 + $0x388] sm:$0xff]
    %v500 = vld [vmem:[%s10 + $0x390] sm:$0xff]
    %v501 = vld [vmem:[%s10 + $0x398] sm:$0xff]
    %v502 = vld [vmem:[%s10 + $0x3a0] sm:$0xff]
    %v503 = vld [vmem:[%s10 + $0x3a8] sm:$0xff]
    %v504 = vld [vmem:[%s10 + $0x3b0] sm:$0xff]
    %v505 = vld [vmem:[%s10 + $0x3b8] sm:$0xff]
    %v506 = vld [vmem:[%s10 + $0x3c0] sm:$0xff]
    %v507 = vld [vmem:[%s10 + $0x3c8] sm:$0xff]
    %v508 = vld [vmem:[%s10 + $0x3d0] sm:$0xff]
    %v509 = vld [vmem:[%s10 + $0x3d8] sm:$0xff]
    %v510 = vld [vmem:[%s10 + $0x3e0] sm:$0xff]
    %v511 = vld [vmem:[%s10 + $0x3e8] sm:$0xff]
    %v512 = vld [vmem:[%s10 + $0x3f0] sm:$0xff]
    %v513 = vld [vmem:[%s10 + $0x3f8] sm:$0xff]
    %v514 = vld [vmem:[%s11] sm:$0xf]
    %v516 = vperm.slane %v514, 0
    %v517 = vperm.slane %v514, 1
    %v518 = vperm.slane %v514, 2
    %v519 = vperm.slane %v514, 3
    %524 = vmatpush.msra.mxu0 %v446
    %525 = vmatpush.msra.mxu0 %v442
    %526 = vmatpush.msra.mxu0 %v438
    %527 = vmatpush.msra.mxu0 %v434
    %528 = vmatpush.msra.mxu0 %v430
    %529 = vmatpush.msra.mxu0 %v426
    %530 = vmatpush.msra.mxu0 %v422
    %531 = vmatpush.msra.mxu0 %v418
    %532 = vmatpush.msra.mxu0 %v414
    %533 = vmatpush.msra.mxu0 %v410
    %534 = vmatpush.msra.mxu0 %v406
    %535 = vmatpush.msra.mxu0 %v402
    %536 = vmatpush.msra.mxu0 %v398
    %537 = vmatpush.msra.mxu0 %v394
    %538 = vmatpush.msra.mxu0 %v390
    %539 = vmatpush.msra.mxu0 %v386
    %540 = vmatmul.f32.gmra.mxu0 %v384
    %v541 = vpop.f32.mrf.mxu0
    %v542 = vadd.f32 %v516, %v541
    %543 = vdwg.mxu0
    %544 = vmatpush.msra.mxu0 %v510
    %545 = vmatpush.msra.mxu0 %v506
    %546 = vmatpush.msra.mxu0 %v502
    %547 = vmatpush.msra.mxu0 %v498
    %548 = vmatpush.msra.mxu0 %v494
    %549 = vmatpush.msra.mxu0 %v490
    %550 = vmatpush.msra.mxu0 %v486
    %551 = vmatpush.msra.mxu0 %v482
    %552 = vmatpush.msra.mxu0 %v478
    %553 = vmatpush.msra.mxu0 %v474
    %554 = vmatpush.msra.mxu0 %v470
    %555 = vmatpush.msra.mxu0 %v466
    %556 = vmatpush.msra.mxu0 %v462
    %557 = vmatpush.msra.mxu0 %v458
    %558 = vmatpush.msra.mxu0 %v454
    %559 = vmatpush.msra.mxu0 %v450
    %560 = vmatmul.f32.gmra.mxu0 %v385
    %v561 = vpop.f32.mrf.mxu0
    %v562 = vadd.f32 %v542, %v561
    %563 = vdwg.mxu0
    %564 = vmatpush.msra.mxu0 %v447
    %565 = vmatpush.msra.mxu0 %v443
    %566 = vmatpush.msra.mxu0 %v439
    %567 = vmatpush.msra.mxu0 %v435
    %568 = vmatpush.msra.mxu0 %v431
    %569 = vmatpush.msra.mxu0 %v427
    %570 = vmatpush.msra.mxu0 %v423
    %571 = vmatpush.msra.mxu0 %v419
    %572 = vmatpush.msra.mxu0 %v415
    %573 = vmatpush.msra.mxu0 %v411
    %574 = vmatpush.msra.mxu0 %v407
    %575 = vmatpush.msra.mxu0 %v403
    %576 = vmatpush.msra.mxu0 %v399
    %577 = vmatpush.msra.mxu0 %v395
    %578 = vmatpush.msra.mxu0 %v391
    %579 = vmatpush.msra.mxu0 %v387
    %580 = vmatmul.f32.gmra.mxu0 %v384
    %v581 = vpop.f32.mrf.mxu0
    %v582 = vadd.f32 %v517, %v581
    %583 = vdwg.mxu0
    %584 = vmatpush.msra.mxu0 %v511
    %585 = vmatpush.msra.mxu0 %v507
    %586 = vmatpush.msra.mxu0 %v503
    %587 = vmatpush.msra.mxu0 %v499
    %588 = vmatpush.msra.mxu0 %v495
    %589 = vmatpush.msra.mxu0 %v491
    %590 = vmatpush.msra.mxu0 %v487
    %591 = vmatpush.msra.mxu0 %v483
    %592 = vmatpush.msra.mxu0 %v479
    %593 = vmatpush.msra.mxu0 %v475
    %594 = vmatpush.msra.mxu0 %v471
    %595 = vmatpush.msra.mxu0 %v467
    %596 = vmatpush.msra.mxu0 %v463
    %597 = vmatpush.msra.mxu0 %v459
    %598 = vmatpush.msra.mxu0 %v455
    %599 = vmatpush.msra.mxu0 %v451
    %600 = vmatmul.f32.gmra.mxu0 %v385
    %v601 = vpop.f32.mrf.mxu0
    %v602 = vadd.f32 %v582, %v601
    %603 = vdwg.mxu0
    %604 = vmatpush.msra.mxu0 %v448
    %605 = vmatpush.msra.mxu0 %v444
    %606 = vmatpush.msra.mxu0 %v440
    %607 = vmatpush.msra.mxu0 %v436
    %608 = vmatpush.msra.mxu0 %v432
    %609 = vmatpush.msra.mxu0 %v428
    %610 = vmatpush.msra.mxu0 %v424
    %611 = vmatpush.msra.mxu0 %v420
    %612 = vmatpush.msra.mxu0 %v416
    %613 = vmatpush.msra.mxu0 %v412
    %614 = vmatpush.msra.mxu0 %v408
    %615 = vmatpush.msra.mxu0 %v404
    %616 = vmatpush.msra.mxu0 %v400
    %617 = vmatpush.msra.mxu0 %v396
    %618 = vmatpush.msra.mxu0 %v392
    %619 = vmatpush.msra.mxu0 %v388
    %620 = vmatmul.f32.gmra.mxu0 %v384
    %v621 = vpop.f32.mrf.mxu0
    %v622 = vadd.f32 %v518, %v621
    %623 = vdwg.mxu0
    %624 = vmatpush.msra.mxu0 %v512
    %625 = vmatpush.msra.mxu0 %v508
    %626 = vmatpush.msra.mxu0 %v504
    %627 = vmatpush.msra.mxu0 %v500
    %628 = vmatpush.msra.mxu0 %v496
    %629 = vmatpush.msra.mxu0 %v492
    %630 = vmatpush.msra.mxu0 %v488
    %631 = vmatpush.msra.mxu0 %v484
    %632 = vmatpush.msra.mxu0 %v480
    %633 = vmatpush.msra.mxu0 %v476
    %634 = vmatpush.msra.mxu0 %v472
    %635 = vmatpush.msra.mxu0 %v468
    %636 = vmatpush.msra.mxu0 %v464
    %637 = vmatpush.msra.mxu0 %v460
    %638 = vmatpush.msra.mxu0 %v456
    %639 = vmatpush.msra.mxu0 %v452
    %640 = vmatmul.f32.gmra.mxu0 %v385
    %v641 = vpop.f32.mrf.mxu0
    %v642 = vadd.f32 %v622, %v641
    %643 = vdwg.mxu0
    %644 = vmatpush.msra.mxu0 %v449
    %645 = vmatpush.msra.mxu0 %v445
    %646 = vmatpush.msra.mxu0 %v441
    %647 = vmatpush.msra.mxu0 %v437
    %648 = vmatpush.msra.mxu0 %v433
    %649 = vmatpush.msra.mxu0 %v429
    %650 = vmatpush.msra.mxu0 %v425
    %651 = vmatpush.msra.mxu0 %v421
    %652 = vmatpush.msra.mxu0 %v417
    %653 = vmatpush.msra.mxu0 %v413
    %654 = vmatpush.msra.mxu0 %v409
    %655 = vmatpush.msra.mxu0 %v405
    %656 = vmatpush.msra.mxu0 %v401
    %657 = vmatpush.msra.mxu0 %v397
    %658 = vmatpush.msra.mxu0 %v393
    %659 = vmatpush.msra.mxu0 %v389
    %660 = vmatmul.f32.gmra.mxu0 %v384
    %v661 = vpop.f32.mrf.mxu0
    %v662 = vadd.f32 %v519, %v661
    %663 = vdwg.mxu0
    %664 = vmatpush.msra.mxu0 %v513
    %665 = vmatpush.msra.mxu0 %v509
    %666 = vmatpush.msra.mxu0 %v505
    %667 = vmatpush.msra.mxu0 %v501
    %668 = vmatpush.msra.mxu0 %v497
    %669 = vmatpush.msra.mxu0 %v493
    %670 = vmatpush.msra.mxu0 %v489
    %671 = vmatpush.msra.mxu0 %v485
    %672 = vmatpush.msra.mxu0 %v481
    %673 = vmatpush.msra.mxu0 %v477
    %674 = vmatpush.msra.mxu0 %v473
    %675 = vmatpush.msra.mxu0 %v469
    %676 = vmatpush.msra.mxu0 %v465
    %677 = vmatpush.msra.mxu0 %v461
    %678 = vmatpush.msra.mxu0 %v457
    %679 = vmatpush.msra.mxu0 %v453
    %680 = vmatmul.f32.gmra.mxu0 %v385
    %v681 = vpop.f32.mrf.mxu0
    %v682 = vadd.f32 %v662, %v681
    %683 = vdwg.mxu0
    %684 = vst [vmem:[%s18] sm:$0xff] %v562
    %685 = vst [vmem:[%s18 + $0x8] sm:$0xff] %v602
    %686 = vst [vmem:[%s18 + $0x10] sm:$0xff] %v642
    %vm687 = vcmask 130048
    %688 = vst.msk [vmem:[%s18 + $0x18] sm:$0xff] %vm687, %v682
    %v689 = vld [vmem:[%s12] sm:$0xff]
    %v690 = vld [vmem:[%s12 + $0x8] sm:$0xff]
    %v691 = vld [vmem:[%s12 + $0x10] sm:$0xff]
    %v692 = vld [vmem:[%s12 + $0x18] sm:$0xff]
    %v693 = vld [vmem:[%s12 + $0x20] sm:$0xff]
    %v694 = vld [vmem:[%s12 + $0x28] sm:$0xff]
    %v695 = vld [vmem:[%s12 + $0x30] sm:$0xff]
    %v696 = vld [vmem:[%s12 + $0x38] sm:$0xff]
    %v697 = vld [vmem:[%s12 + $0x40] sm:$0xff]
    %v698 = vld [vmem:[%s12 + $0x48] sm:$0xff]
    %v699 = vld [vmem:[%s12 + $0x50] sm:$0xff]
    %v700 = vld [vmem:[%s12 + $0x58] sm:$0xff]
    %v701 = vld [vmem:[%s12 + $0x60] sm:$0xff]
    %v702 = vld [vmem:[%s12 + $0x68] sm:$0xff]
    %v703 = vld [vmem:[%s12 + $0x70] sm:$0xff]
    %v704 = vld [vmem:[%s12 + $0x78] sm:$0xff]
    %v705 = vld [vmem:[%s13] sm:$0x1]
    %v707 = vperm.slane %v705, 0
    %709 = vmatpush.msra.mxu0 %v704
    %710 = vmatpush.msra.mxu0 %v703
    %711 = vmatpush.msra.mxu0 %v702
    %712 = vmatpush.msra.mxu0 %v701
    %713 = vmatpush.msra.mxu0 %v700
    %714 = vmatpush.msra.mxu0 %v699
    %715 = vmatpush.msra.mxu0 %v698
    %716 = vmatpush.msra.mxu0 %v697
    %717 = vmatpush.msra.mxu0 %v696
    %718 = vmatpush.msra.mxu0 %v695
    %719 = vmatpush.msra.mxu0 %v694
    %720 = vmatpush.msra.mxu0 %v693
    %721 = vmatpush.msra.mxu0 %v692
    %722 = vmatpush.msra.mxu0 %v691
    %723 = vmatpush.msra.mxu0 %v690
    %724 = vmatpush.msra.mxu0 %v689
    %725 = vmatmul.f32.gmra.mxu0 %v149
    %v726 = vpop.f32.mrf.mxu0
    %v727 = vadd.f32 %v707, %v726
    %728 = vdwg.mxu0
    %v729 = vmax.f32 %v727, 0.0
    %v730 = vld [vmem:[%s14] sm:$0xff]
    %v731 = vld [vmem:[%s14 + $0x8] sm:$0xff]
    %v732 = vld [vmem:[%s14 + $0x10] sm:$0xff]
    %v733 = vld [vmem:[%s14 + $0x18] sm:$0xff]
    %v734 = vld [vmem:[%s14 + $0x20] sm:$0xff]
    %v735 = vld [vmem:[%s14 + $0x28] sm:$0xff]
    %v736 = vld [vmem:[%s14 + $0x30] sm:$0xff]
    %v737 = vld [vmem:[%s14 + $0x38] sm:$0xff]
    %v738 = vld [vmem:[%s14 + $0x40] sm:$0xff]
    %v739 = vld [vmem:[%s14 + $0x48] sm:$0xff]
    %v740 = vld [vmem:[%s14 + $0x50] sm:$0xff]
    %v741 = vld [vmem:[%s14 + $0x58] sm:$0xff]
    %v742 = vld [vmem:[%s14 + $0x60] sm:$0xff]
    %v743 = vld [vmem:[%s14 + $0x68] sm:$0xff]
    %v744 = vld [vmem:[%s14 + $0x70] sm:$0xff]
    %v745 = vld [vmem:[%s14 + $0x78] sm:$0xff]
    %v746 = vld [vmem:[%s14 + $0x80] sm:$0xff]
    %v747 = vld [vmem:[%s14 + $0x88] sm:$0xff]
    %v748 = vld [vmem:[%s14 + $0x90] sm:$0xff]
    %v749 = vld [vmem:[%s14 + $0x98] sm:$0xff]
    %v750 = vld [vmem:[%s14 + $0xa0] sm:$0xff]
    %v751 = vld [vmem:[%s14 + $0xa8] sm:$0xff]
    %v752 = vld [vmem:[%s14 + $0xb0] sm:$0xff]
    %v753 = vld [vmem:[%s14 + $0xb8] sm:$0xff]
    %v754 = vld [vmem:[%s14 + $0xc0] sm:$0xff]
    %v755 = vld [vmem:[%s14 + $0xc8] sm:$0xff]
    %v756 = vld [vmem:[%s14 + $0xd0] sm:$0xff]
    %v757 = vld [vmem:[%s14 + $0xd8] sm:$0xff]
    %v758 = vld [vmem:[%s14 + $0xe0] sm:$0xff]
    %v759 = vld [vmem:[%s14 + $0xe8] sm:$0xff]
    %v760 = vld [vmem:[%s14 + $0xf0] sm:$0xff]
    %v761 = vld [vmem:[%s14 + $0xf8] sm:$0xff]
    %v762 = vld [vmem:[%s14 + $0x100] sm:$0xff]
    %v763 = vld [vmem:[%s14 + $0x108] sm:$0xff]
    %v764 = vld [vmem:[%s14 + $0x110] sm:$0xff]
    %v765 = vld [vmem:[%s14 + $0x118] sm:$0xff]
    %v766 = vld [vmem:[%s14 + $0x120] sm:$0xff]
    %v767 = vld [vmem:[%s14 + $0x128] sm:$0xff]
    %v768 = vld [vmem:[%s14 + $0x130] sm:$0xff]
    %v769 = vld [vmem:[%s14 + $0x138] sm:$0xff]
    %v770 = vld [vmem:[%s14 + $0x140] sm:$0xff]
    %v771 = vld [vmem:[%s14 + $0x148] sm:$0xff]
    %v772 = vld [vmem:[%s14 + $0x150] sm:$0xff]
    %v773 = vld [vmem:[%s14 + $0x158] sm:$0xff]
    %v774 = vld [vmem:[%s14 + $0x160] sm:$0xff]
    %v775 = vld [vmem:[%s14 + $0x168] sm:$0xff]
    %v776 = vld [vmem:[%s14 + $0x170] sm:$0xff]
    %v777 = vld [vmem:[%s14 + $0x178] sm:$0xff]
    %v778 = vld [vmem:[%s14 + $0x180] sm:$0xff]
    %v779 = vld [vmem:[%s14 + $0x188] sm:$0xff]
    %v780 = vld [vmem:[%s14 + $0x190] sm:$0xff]
    %v781 = vld [vmem:[%s14 + $0x198] sm:$0xff]
    %v782 = vld [vmem:[%s14 + $0x1a0] sm:$0xff]
    %v783 = vld [vmem:[%s14 + $0x1a8] sm:$0xff]
    %v784 = vld [vmem:[%s14 + $0x1b0] sm:$0xff]
    %v785 = vld [vmem:[%s14 + $0x1b8] sm:$0xff]
    %v786 = vld [vmem:[%s14 + $0x1c0] sm:$0xff]
    %v787 = vld [vmem:[%s14 + $0x1c8] sm:$0xff]
    %v788 = vld [vmem:[%s14 + $0x1d0] sm:$0xff]
    %v789 = vld [vmem:[%s14 + $0x1d8] sm:$0xff]
    %v790 = vld [vmem:[%s14 + $0x1e0] sm:$0xff]
    %v791 = vld [vmem:[%s14 + $0x1e8] sm:$0xff]
    %v792 = vld [vmem:[%s14 + $0x1f0] sm:$0xff]
    %v793 = vld [vmem:[%s14 + $0x1f8] sm:$0xff]
    %v794 = vld [vmem:[%s15] sm:$0xf]
    %v796 = vperm.slane %v794, 0
    %v797 = vperm.slane %v794, 1
    %v798 = vperm.slane %v794, 2
    %v799 = vperm.slane %v794, 3
    %804 = vmatpush.msra.mxu0 %v790
    %805 = vmatpush.msra.mxu0 %v786
    %806 = vmatpush.msra.mxu0 %v782
    %807 = vmatpush.msra.mxu0 %v778
    %808 = vmatpush.msra.mxu0 %v774
    %809 = vmatpush.msra.mxu0 %v770
    %810 = vmatpush.msra.mxu0 %v766
    %811 = vmatpush.msra.mxu0 %v762
    %812 = vmatpush.msra.mxu0 %v758
    %813 = vmatpush.msra.mxu0 %v754
    %814 = vmatpush.msra.mxu0 %v750
    %815 = vmatpush.msra.mxu0 %v746
    %816 = vmatpush.msra.mxu0 %v742
    %817 = vmatpush.msra.mxu0 %v738
    %818 = vmatpush.msra.mxu0 %v734
    %819 = vmatpush.msra.mxu0 %v730
    %820 = vmatmul.f32.gmra.mxu0 %v729
    %v821 = vpop.f32.mrf.mxu0
    %v822 = vadd.f32 %v796, %v821
    %823 = vdwg.mxu0
    %824 = vmatpush.msra.mxu0 %v791
    %825 = vmatpush.msra.mxu0 %v787
    %826 = vmatpush.msra.mxu0 %v783
    %827 = vmatpush.msra.mxu0 %v779
    %828 = vmatpush.msra.mxu0 %v775
    %829 = vmatpush.msra.mxu0 %v771
    %830 = vmatpush.msra.mxu0 %v767
    %831 = vmatpush.msra.mxu0 %v763
    %832 = vmatpush.msra.mxu0 %v759
    %833 = vmatpush.msra.mxu0 %v755
    %834 = vmatpush.msra.mxu0 %v751
    %835 = vmatpush.msra.mxu0 %v747
    %836 = vmatpush.msra.mxu0 %v743
    %837 = vmatpush.msra.mxu0 %v739
    %838 = vmatpush.msra.mxu0 %v735
    %839 = vmatpush.msra.mxu0 %v731
    %840 = vmatmul.f32.gmra.mxu0 %v729
    %v841 = vpop.f32.mrf.mxu0
    %v842 = vadd.f32 %v797, %v841
    %843 = vdwg.mxu0
    %844 = vmatpush.msra.mxu0 %v792
    %845 = vmatpush.msra.mxu0 %v788
    %846 = vmatpush.msra.mxu0 %v784
    %847 = vmatpush.msra.mxu0 %v780
    %848 = vmatpush.msra.mxu0 %v776
    %849 = vmatpush.msra.mxu0 %v772
    %850 = vmatpush.msra.mxu0 %v768
    %851 = vmatpush.msra.mxu0 %v764
    %852 = vmatpush.msra.mxu0 %v760
    %853 = vmatpush.msra.mxu0 %v756
    %854 = vmatpush.msra.mxu0 %v752
    %855 = vmatpush.msra.mxu0 %v748
    %856 = vmatpush.msra.mxu0 %v744
    %857 = vmatpush.msra.mxu0 %v740
    %858 = vmatpush.msra.mxu0 %v736
    %859 = vmatpush.msra.mxu0 %v732
    %860 = vmatmul.f32.gmra.mxu0 %v729
    %v861 = vpop.f32.mrf.mxu0
    %v862 = vadd.f32 %v798, %v861
    %863 = vdwg.mxu0
    %864 = vmatpush.msra.mxu0 %v793
    %865 = vmatpush.msra.mxu0 %v789
    %866 = vmatpush.msra.mxu0 %v785
    %867 = vmatpush.msra.mxu0 %v781
    %868 = vmatpush.msra.mxu0 %v777
    %869 = vmatpush.msra.mxu0 %v773
    %870 = vmatpush.msra.mxu0 %v769
    %871 = vmatpush.msra.mxu0 %v765
    %872 = vmatpush.msra.mxu0 %v761
    %873 = vmatpush.msra.mxu0 %v757
    %874 = vmatpush.msra.mxu0 %v753
    %875 = vmatpush.msra.mxu0 %v749
    %876 = vmatpush.msra.mxu0 %v745
    %877 = vmatpush.msra.mxu0 %v741
    %878 = vmatpush.msra.mxu0 %v737
    %879 = vmatpush.msra.mxu0 %v733
    %880 = vmatmul.f32.gmra.mxu0 %v729
    %v881 = vpop.f32.mrf.mxu0
    %v882 = vadd.f32 %v799, %v881
    %883 = vdwg.mxu0
    %884 = vst.msk [vmem:[#allocation2] sm:$0xff] %vm190, %v822
    %v885 = vmul.f32 %v562, %v822
    %v886 = vmul.f32 %v602, %v842
    %v887 = vmul.f32 %v642, %v862
    %v888 = vmul.f32 %v682, %v882
    %v889 = vld [vmem:[%s16] sm:$0xff]
    %v890 = vld [vmem:[%s16 + $0x8] sm:$0xff]
    %v891 = vld [vmem:[%s16 + $0x10] sm:$0xff]
    %v892 = vld [vmem:[%s16 + $0x18] sm:$0xff]
    %v893 = vld [vmem:[%s16 + $0x20] sm:$0xff]
    %v894 = vld [vmem:[%s16 + $0x28] sm:$0xff]
    %v895 = vld [vmem:[%s16 + $0x30] sm:$0xff]
    %v896 = vld [vmem:[%s16 + $0x38] sm:$0xff]
    %v897 = vld [vmem:[%s16 + $0x40] sm:$0xff]
    %v898 = vld [vmem:[%s16 + $0x48] sm:$0xff]
    %v899 = vld [vmem:[%s16 + $0x50] sm:$0xff]
    %v900 = vld [vmem:[%s16 + $0x58] sm:$0xff]
    %v901 = vld [vmem:[%s16 + $0x60] sm:$0xff]
    %v902 = vld [vmem:[%s16 + $0x68] sm:$0xff]
    %v903 = vld [vmem:[%s16 + $0x70] sm:$0xff]
    %v904 = vld [vmem:[%s16 + $0x78] sm:$0xff]
    %v905 = vld [vmem:[%s16 + $0x80] sm:$0xff]
    %v906 = vld [vmem:[%s16 + $0x88] sm:$0xff]
    %v907 = vld [vmem:[%s16 + $0x90] sm:$0xff]
    %v908 = vld [vmem:[%s16 + $0x98] sm:$0xff]
    %v909 = vld [vmem:[%s16 + $0xa0] sm:$0xff]
    %v910 = vld [vmem:[%s16 + $0xa8] sm:$0xff]
    %v911 = vld [vmem:[%s16 + $0xb0] sm:$0xff]
    %v912 = vld [vmem:[%s16 + $0xb8] sm:$0xff]
    %v913 = vld [vmem:[%s16 + $0xc0] sm:$0xff]
    %v914 = vld [vmem:[%s16 + $0xc8] sm:$0xff]
    %v915 = vld [vmem:[%s16 + $0xd0] sm:$0xff]
    %v916 = vld [vmem:[%s16 + $0xd8] sm:$0xff]
    %v917 = vld [vmem:[%s16 + $0xe0] sm:$0xff]
    %v918 = vld [vmem:[%s16 + $0xe8] sm:$0xff]
    %v919 = vld [vmem:[%s16 + $0xf0] sm:$0xff]
    %v920 = vld [vmem:[%s16 + $0xf8] sm:$0xff]
    %v921 = vld [vmem:[%s16 + $0x100] sm:$0xff]
    %v922 = vld [vmem:[%s16 + $0x108] sm:$0xff]
    %v923 = vld [vmem:[%s16 + $0x110] sm:$0xff]
    %v924 = vld [vmem:[%s16 + $0x118] sm:$0xff]
    %v925 = vld [vmem:[%s16 + $0x120] sm:$0xff]
    %v926 = vld [vmem:[%s16 + $0x128] sm:$0xff]
    %v927 = vld [vmem:[%s16 + $0x130] sm:$0xff]
    %v928 = vld [vmem:[%s16 + $0x138] sm:$0xff]
    %v929 = vld [vmem:[%s16 + $0x140] sm:$0xff]
    %v930 = vld [vmem:[%s16 + $0x148] sm:$0xff]
    %v931 = vld [vmem:[%s16 + $0x150] sm:$0xff]
    %v932 = vld [vmem:[%s16 + $0x158] sm:$0xff]
    %v933 = vld [vmem:[%s16 + $0x160] sm:$0xff]
    %v934 = vld [vmem:[%s16 + $0x168] sm:$0xff]
    %v935 = vld [vmem:[%s16 + $0x170] sm:$0xff]
    %v936 = vld [vmem:[%s16 + $0x178] sm:$0xff]
    %v937 = vld [vmem:[%s16 + $0x180] sm:$0xff]
    %v938 = vld [vmem:[%s16 + $0x188] sm:$0xff]
    %v940 = vsel %vm687, %v888, 0
    %942 = vmatpush.msra.mxu0 %v904
    %943 = vmatpush.msra.mxu0 %v903
    %944 = vmatpush.msra.mxu0 %v902
    %945 = vmatpush.msra.mxu0 %v901
    %946 = vmatpush.msra.mxu0 %v900
    %947 = vmatpush.msra.mxu0 %v899
    %948 = vmatpush.msra.mxu0 %v898
    %949 = vmatpush.msra.mxu0 %v897
    %950 = vmatpush.msra.mxu0 %v896
    %951 = vmatpush.msra.mxu0 %v895
    %952 = vmatpush.msra.mxu0 %v894
    %953 = vmatpush.msra.mxu0 %v893
    %954 = vmatpush.msra.mxu0 %v892
    %955 = vmatpush.msra.mxu0 %v891
    %956 = vmatpush.msra.mxu0 %v890
    %957 = vmatpush.msra.mxu0 %v889
    %958 = vmatmul.f32.gmra.mxu0 %v885
    %v959 = vpop.f32.mrf.mxu0
    %v960 = vadd.f32 0.0, %v959
    %961 = vdwg.mxu0
    %962 = vmatpush.msra.mxu0 %v920
    %963 = vmatpush.msra.mxu0 %v919
    %964 = vmatpush.msra.mxu0 %v918
    %965 = vmatpush.msra.mxu0 %v917
    %966 = vmatpush.msra.mxu0 %v916
    %967 = vmatpush.msra.mxu0 %v915
    %968 = vmatpush.msra.mxu0 %v914
    %969 = vmatpush.msra.mxu0 %v913
    %970 = vmatpush.msra.mxu0 %v912
    %971 = vmatpush.msra.mxu0 %v911
    %972 = vmatpush.msra.mxu0 %v910
    %973 = vmatpush.msra.mxu0 %v909
    %974 = vmatpush.msra.mxu0 %v908
    %975 = vmatpush.msra.mxu0 %v907
    %976 = vmatpush.msra.mxu0 %v906
    %977 = vmatpush.msra.mxu0 %v905
    %978 = vmatmul.f32.gmra.mxu0 %v886
    %v979 = vpop.f32.mrf.mxu0
    %v980 = vadd.f32 %v960, %v979
    %981 = vdwg.mxu0
    %982 = vmatpush.msra.mxu0 %v936
    %983 = vmatpush.msra.mxu0 %v935
    %984 = vmatpush.msra.mxu0 %v934
    %985 = vmatpush.msra.mxu0 %v933
    %986 = vmatpush.msra.mxu0 %v932
    %987 = vmatpush.msra.mxu0 %v931
    %988 = vmatpush.msra.mxu0 %v930
    %989 = vmatpush.msra.mxu0 %v929
    %990 = vmatpush.msra.mxu0 %v928
    %991 = vmatpush.msra.mxu0 %v927
    %992 = vmatpush.msra.mxu0 %v926
    %993 = vmatpush.msra.mxu0 %v925
    %994 = vmatpush.msra.mxu0 %v924
    %995 = vmatpush.msra.mxu0 %v923
    %996 = vmatpush.msra.mxu0 %v922
    %997 = vmatpush.msra.mxu0 %v921
    %998 = vmatmul.f32.gmra.mxu0 %v887
    %v999 = vpop.f32.mrf.mxu0
    %v1000 = vadd.f32 %v980, %v999
    %1001 = vdwg.mxu0
    %1002 = vmatpush.msra.mxu0 0.0
    %1003 = vmatpush.msra.mxu0 0.0
    %1004 = vmatpush.msra.mxu0 0.0
    %1005 = vmatpush.msra.mxu0 0.0
    %1006 = vmatpush.msra.mxu0 0.0
    %1007 = vmatpush.msra.mxu0 0.0
    %1008 = vmatpush.msra.mxu0 0.0
    %1009 = vmatpush.msra.mxu0 0.0
    %1010 = vmatpush.msra.mxu0 0.0
    %1011 = vmatpush.msra.mxu0 0.0
    %1012 = vmatpush.msra.mxu0 0.0
    %1013 = vmatpush.msra.mxu0 0.0
    %1014 = vmatpush.msra.mxu0 0.0
    %1015 = vmatpush.msra.mxu0 0.0
    %1016 = vmatpush.msra.mxu0 %v938
    %1017 = vmatpush.msra.mxu0 %v937
    %1018 = vmatmul.f32.gmra.mxu0 %v940
    %v1019 = vpop.f32.mrf.mxu0
    %v1020 = vadd.f32 %v1000, %v1019
    %1021 = vdwg.mxu0
    %vm1022 = vcmask 31744
    %1023 = vst.msk [vmem:[%s17] sm:$0xff] %vm1022, %v1020
    // Predicated region
    $region70: #{state_goal_rbf_usf.1} parent=1 // pred_check
      _
    $region71: #{state_goal_rbf_usf.1} parent=1 // pred_check_branch
      %1025 = sbr.rel (0) target = $region73
    $region72: #{state_goal_rbf_usf.1} parent=1 // pred_region
      _
    $region73: #{state_goal_rbf_usf.1} parent=1 // pred_fallthru
      _
    // Predicated region
    $region74: #{state_goal_rbf_usf.1} parent=1 // pred_check
      _
    $region75: #{state_goal_rbf_usf.1} parent=1 // pred_check_branch
      %1027 = sbr.rel (0) target = $region77
    $region76: #{state_goal_rbf_usf.1} parent=1 // pred_region
      _
    $region77: #{state_goal_rbf_usf.1} parent=1 // pred_fallthru
      _
    // Predicated region
    $region78: #{state_goal_rbf_usf.1} parent=1 // pred_check
      _
    $region79: #{state_goal_rbf_usf.1} parent=1 // pred_check_branch
      %1029 = sbr.rel (0) target = $region81
    $region80: #{state_goal_rbf_usf.1} parent=1 // pred_region
      %1031 = vsyncadd [#allocation3], 0
      %s1033 = sshll.u32 [#allocation2], 4
      %s1034 = int_to_ptr.vmem [resolvable:$true] %s1033
      %s1035 = sshll.u32 %s19, 4
      %s1036 = int_to_ptr.hbm [resolvable:$true] %s1035
      %1038 = dma.vmem_to_hbm [thread:$0]  %s1034, 128, %s1036, [#allocation3]
    $region81: #{state_goal_rbf_usf.1} parent=1 // pred_fallthru
      _
    // Predicated region
    $region82: #{state_goal_rbf_usf.1} parent=1 // pred_check
      _
    $region83: #{state_goal_rbf_usf.1} parent=1 // pred_check_branch
      %1040 = sbr.rel (0) target = $region85
    $region84: #{state_goal_rbf_usf.1} parent=1 // pred_region
      %1042 = vsyncadd [#allocation5], 0
      %s1044 = sshll.u32 [#allocation4], 4
      %s1045 = int_to_ptr.vmem [resolvable:$true] %s1044
      %s1046 = sshll.u32 %s20, 4
      %s1047 = int_to_ptr.hbm [resolvable:$true] %s1046
      %1049 = dma.vmem_to_hbm [thread:$0]  %s1045, 128, %s1047, [#allocation5]
    $region85: #{state_goal_rbf_usf.1} parent=1 // pred_fallthru
      _
    // Predicated region
    $region86: #{state_goal_rbf_usf.1} parent=1 // pred_check
      _
    $region87: #{state_goal_rbf_usf.1} parent=1 // pred_check_branch
      %1051 = sbr.rel (0) target = $region89
    $region88: #{state_goal_rbf_usf.1} parent=1 // pred_region
      _
    $region89: #{state_goal_rbf_usf.1} parent=1 // pred_fallthru
      _
    // Predicated region
    $region90: #{state_goal_rbf_usf.1} parent=1 // pred_check
      _
    $region91: #{state_goal_rbf_usf.1} parent=1 // pred_check_branch
      %1053 = sbr.rel (0) target = $region93
    $region92: #{state_goal_rbf_usf.1} parent=1 // pred_region
      _
    $region93: #{state_goal_rbf_usf.1} parent=1 // pred_fallthru
      _
    // Predicated region
    $region94: #{state_goal_rbf_usf.1} parent=1 // pred_check
      _
    $region95: #{state_goal_rbf_usf.1} parent=1 // pred_check_branch
      %1055 = sbr.rel (0) target = $region97
    $region96: #{state_goal_rbf_usf.1} parent=1 // pred_region
      %1057 = dma.done [#allocation3], 128
    $region97: #{state_goal_rbf_usf.1} parent=1 // pred_fallthru
      _
    // Predicated region
    $region98: #{state_goal_rbf_usf.1} parent=1 // pred_check
      _
    $region99: #{state_goal_rbf_usf.1} parent=1 // pred_check_branch
      %1059 = sbr.rel (0) target = $region101
    $region100: #{state_goal_rbf_usf.1} parent=1 // pred_region
      %1061 = dma.done [#allocation5], 128
    $region101: #{state_goal_rbf_usf.1} parent=1 // pred_fallthru
      _
    %1062 = vsyncpa [#allocation3], 1
    %1063 = vsyncpa [#allocation5], 1

</llo_original>
